<compile_context>
chip_gen: v7x
topology: tpu7x:2x2x1
jax: 0.10.0
libtpu: 0.0.40
codegen_flags: <defaults>
</compile_context>

<pallas_src>
import functools

import jax
import jax.numpy as jnp
from jax import lax
from jax.experimental import pallas as pl
from jax.experimental.pallas import tpu as pltpu


def _ru(x, m):
    return ((x + m - 1) // m) * m


# --------------------------------------------------------------------------- #
# Kernel
# --------------------------------------------------------------------------- #
def _bagnet_bottleneck_kernel(
    x_ref, w1_ref, s1_ref, b1_ref, w2_ref, s2_ref, b2_ref, w3_ref, s3_ref, b3_ref,
    o_ref, *, K, S, TH, Wout, DX):
    RR, THp, Wcp, Cinp = x_ref.shape[1:]        # RR = S*S residue planes
    Cmidp = w1_ref.shape[1]
    Coutp = w3_ref.shape[1]

    # ---- conv1: 1x1 conv as ONE (M1, Cin) x (Cin, Cmid) MXU matmul -----------
    x2 = x_ref[0].reshape(RR * THp * Wcp, Cinp)                      # bf16
    h1 = jnp.dot(x2, w1_ref[...], preferred_element_type=jnp.float32)
    h1 = jnp.maximum(h1 * s1_ref[...] + b1_ref[...], 0.0)            # BN + ReLU (f32)
    h1 = h1.astype(jnp.bfloat16).reshape(RR, THp, Wcp, Cmidp)

    # ---- pre-shift h1 along W once per distinct tap shift dx (<= ceil(K/S)-1)
    # instead of K*K unaligned sublane slices; wrapped/garbage cols land beyond
    # col Wout-1 and are discarded at the end.
    shifts = [h1]
    for dx in range(1, DX + 1):
        pad = jnp.zeros((RR, THp, dx, Cmidp), jnp.bfloat16)
        shifts.append(jnp.concatenate([h1[:, :, dx:, :], pad], axis=2))

    # ---- conv2: KxK / stride-S conv as K*K (TH*Wcp, Cmid)x(Cmid, Cmid) matmuls
    acc = jnp.zeros((TH * Wcp, Cmidp), jnp.float32)
    for ky in range(K):
        ry, dy = ky % S, ky // S
        for kx in range(K):
            rx, dx = kx % S, kx // S
            sub = shifts[dx][ry * S + rx, dy:dy + TH]                # (TH, Wcp, Cmid)
            acc = acc + jnp.dot(sub.reshape(TH * Wcp, Cmidp),
                                w2_ref[ky * K + kx],
                                preferred_element_type=jnp.float32)
    h2 = jnp.maximum(acc * s2_ref[...] + b2_ref[...], 0.0).astype(jnp.bfloat16)

    # ---- conv3: 1x1 conv + folded BN (no activation) --------------------------
    h3 = jnp.dot(h2, w3_ref[...], preferred_element_type=jnp.float32)
    y = (h3 * s3_ref[...] + b3_ref[...]).reshape(TH, Wcp, Coutp)
    o_ref[0] = y[:, :Wout, :].astype(o_ref.dtype)                    # 128-lane stores


# --------------------------------------------------------------------------- #
# Wrapper
# --------------------------------------------------------------------------- #
def _fold_bn(gamma, beta, mean, var, eps=1e-5):
    scale = gamma / jnp.sqrt(var + eps)
    bias = beta - mean * scale
    return scale, bias


def _pad_vec(v, n):
    return jnp.pad(v, (0, n - v.shape[0])).astype(jnp.float32).reshape(1, n)


def _vmem_estimate(RR, THp, Wcp, Cinp, Cmidp, Coutp, TH, Wout, K, DX):
    bf, f4 = 2, 4
    xblk = 2 * RR * THp * Wcp * Cinp * bf                 # double-buffered input block
    oblk = 2 * TH * Wout * Coutp * f4                     # double-buffered output block
    wts = 2 * ((Cinp * Cmidp + K * K * Cmidp * Cmidp + Cmidp * Coutp) * bf
               + (4 * Cmidp + 2 * Coutp) * f4)
    h1 = RR * THp * Wcp * Cmidp * (f4 + bf)               # f32 result + bf16 copy
    shift = DX * RR * THp * Wcp * Cmidp * bf
    mid = TH * Wcp * (Cmidp * (2 * f4 + bf) + 2 * Coutp * f4)
    return xblk + oblk + wts + h1 + shift + mid


def bagnet_bottleneck_forward(x_nchw, params, kernel_size, stride):
    K, S = int(kernel_size), int(stride)
    N, Cin, H, W = x_nchw.shape
    w1, s1, b1, w2, s2, b2, w3, s3, b3 = params
    Cmid, Cout = w1.shape[1], w3.shape[1]
    Hout = (H - K) // S + 1
    Wout = (W - K) // S + 1
    DX = (K - 1) // S                       # halo (in residue-plane coordinates)
    RR = S * S

    # Channel padding to 128-lane multiples (lane-dense vregs / unmasked stores).
    Cinp, Cmidp, Coutp = _ru(Cin, 128), _ru(Cmid, 128), _ru(Cout, 128)

    # Output-row tile size: largest tile whose double-buffered footprint fits a
    # conservative per-core budget (v7x: 64 MiB VMEM shared by 2 TensorCores).
    Wcp = _ru(Wout + DX, 8)
    budget = 12 * 1024 * 1024
    TH = min(Hout, 128)
    while TH > 8 and _vmem_estimate(RR, TH + DX, Wcp, Cinp, Cmidp, Coutp,
                                    TH, Wout, K, DX) > budget:
        TH = (TH + 1) // 2
    TH = min(TH, Hout)
    nH = -(-Hout // TH)
    THp = TH + DX
    Hc = nH * TH + DX                       # residue-plane rows materialized
    G = N * nH

    # ---- wrapper-side layout plumbing (zero-pad + residue-plane decomposition) --
    Hfull, Wfull = S * Hc, S * Wcp
    x_nhwc = jnp.transpose(x_nchw, (0, 2, 3, 1)).astype(jnp.bfloat16)
    Hs, Ws = min(H, Hfull), min(W, Wfull)
    canvas = jnp.zeros((N, Hfull, Wfull, Cinp), jnp.bfloat16)
    canvas = canvas.at[:, :Hs, :Ws, :Cin].set(x_nhwc[:, :Hs, :Ws, :])
    # planes[n, ry, rx, p, q, c] = x[n, S*p + ry, S*q + rx, c]
    planes = canvas.reshape(N, Hc, S, Wcp, S, Cinp).transpose(0, 2, 4, 1, 3, 5)
    # Row blocks with a DX-row halo baked in (tiny duplication; enables BlockSpec
    # auto-pipelining of overlapping windows).
    row_ids = jnp.arange(nH)[:, None] * TH + jnp.arange(THp)[None, :]
    xb = jnp.take(planes, row_ids, axis=3)                # (N, S, S, nH, THp, Wcp, Cinp)
    xb = xb.transpose(0, 3, 1, 2, 4, 5, 6).reshape(G, RR, THp, Wcp, Cinp)

    # ---- weights / folded-BN params: bf16 matmul operands, f32 scale/bias -------
    w1p = jnp.zeros((Cinp, Cmidp), jnp.bfloat16).at[:Cin, :Cmid].set(
        w1.astype(jnp.bfloat16))
    w2p = jnp.zeros((K, K, Cmidp, Cmidp), jnp.bfloat16).at[:, :, :Cmid, :Cmid].set(
        w2.astype(jnp.bfloat16)).reshape(K * K, Cmidp, Cmidp)
    w3p = jnp.zeros((Cmidp, Coutp), jnp.bfloat16).at[:Cmid, :Cout].set(
        w3.astype(jnp.bfloat16))
    s1p, b1p = _pad_vec(s1, Cmidp), _pad_vec(b1, Cmidp)
    s2p, b2p = _pad_vec(s2, Cmidp), _pad_vec(b2, Cmidp)
    s3p, b3p = _pad_vec(s3, Coutp), _pad_vec(b3, Coutp)

    kernel = functools.partial(_bagnet_bottleneck_kernel,
                               K=K, S=S, TH=TH, Wout=Wout, DX=DX)

    def const_spec(shape):
        return pl.BlockSpec(shape, lambda g: (0,) * len(shape))

    flops = 2 * G * (RR * THp * Wcp * Cinp * Cmidp
                     + K * K * TH * Wcp * Cmidp * Cmidp
                     + TH * Wcp * Cmidp * Coutp)
    bytes_accessed = (xb.size * 2 + G * TH * Wout * Coutp * 4
                      + (w1p.size + w2p.size + w3p.size) * 2
                      + (4 * Cmidp + 2 * Coutp) * 4)
    vmem_limit = int(min(max(2 * _vmem_estimate(RR, THp, Wcp, Cinp, Cmidp, Coutp,
                                                TH, Wout, K, DX),
                             32 * 1024 * 1024), 48 * 1024 * 1024))

    out = pl.pallas_call(
        kernel,
        out_shape=jax.ShapeDtypeStruct((G, TH, Wout, Coutp), jnp.float32),
        grid=(G,),
        in_specs=[
            pl.BlockSpec((1, RR, THp, Wcp, Cinp), lambda g: (g, 0, 0, 0, 0)),
            const_spec((Cinp, Cmidp)),
            const_spec((1, Cmidp)), const_spec((1, Cmidp)),
            const_spec((K * K, Cmidp, Cmidp)),
            const_spec((1, Cmidp)), const_spec((1, Cmidp)),
            const_spec((Cmidp, Coutp)),
            const_spec((1, Coutp)), const_spec((1, Coutp)),
        ],
        out_specs=pl.BlockSpec((1, TH, Wout, Coutp), lambda g: (g, 0, 0, 0)),
        compiler_params=pltpu.CompilerParams(
            dimension_semantics=("parallel",),
            vmem_limit_bytes=vmem_limit),
        cost_estimate=pl.CostEstimate(flops=flops, transcendentals=0,
                                      bytes_accessed=bytes_accessed),
    )(xb, w1p, s1p, b1p, w2p, s2p, b2p, w3p, s3p, b3p)

    out = out.reshape(N, nH * TH, Wout, Coutp)[:, :Hout, :, :Cout]
    return jnp.transpose(out, (0, 3, 1, 2))               # back to NCHW


# --------------------------------------------------------------------------- #
# Params / reference
# --------------------------------------------------------------------------- #
def init_params(key, Cin, Cout, K, bottleneck_factor=4, eps=1e-5):
    Cmid = Cout // bottleneck_factor
    ks = jax.random.split(key, 6)

    def bn(k, C):
        k1, k2, k3, k4 = jax.random.split(k, 4)
        gamma = 1.0 + 0.1 * jax.random.normal(k1, (C,), jnp.float32)
        beta = 0.1 * jax.random.normal(k2, (C,), jnp.float32)
        mean = 0.1 * jax.random.normal(k3, (C,), jnp.float32)
        var = jax.random.uniform(k4, (C,), jnp.float32, 0.5, 1.5)
        return _fold_bn(gamma, beta, mean, var, eps)

    # PyTorch Conv2d weight layouts (O, I, kH, kW), bias=False.
    w1_t = 0.5 * jax.random.normal(ks[0], (Cmid, Cin, 1, 1), jnp.float32)
    w2_t = 0.5 * jax.random.normal(ks[1], (Cmid, Cmid, K, K), jnp.float32)
    w3_t = 0.5 * jax.random.normal(ks[2], (Cout, Cmid, 1, 1), jnp.float32)
    s1, b1 = bn(ks[3], Cmid)
    s2, b2 = bn(ks[4], Cmid)
    s3, b3 = bn(ks[5], Cout)

    # Rearranged for the kernel's matmul form.
    w1 = w1_t[:, :, 0, 0].T                    # (Cin, Cmid)
    w2 = jnp.transpose(w2_t, (2, 3, 1, 0))     # (K, K, Cmid_in, Cmid_out)
    w3 = w3_t[:, :, 0, 0].T                    # (Cmid, Cout)
    params = (w1, s1, b1, w2, s2, b2, w3, s3, b3)
    torch_weights = (w1_t, w2_t, w3_t)
    return params, torch_weights


def reference_forward(x_nchw, torch_weights, params, K, S):
    # Precision-matched reference: bf16 conv operands, f32 accumulation and BN/ReLU.
    w1_t, w2_t, w3_t = torch_weights
    _, s1, b1, _, s2, b2, _, s3, b3 = params

    def conv_bn(x, w, scale, bias, stride, relu):
        y = lax.conv_general_dilated(
            x.astype(jnp.bfloat16), w.astype(jnp.bfloat16), (stride, stride), 'VALID',
            dimension_numbers=('NCHW', 'OIHW', 'NCHW'),
            preferred_element_type=jnp.float32)
        y = y * scale[None, :, None, None] + bias[None, :, None, None]
        return jnp.maximum(y, 0.0) if relu else y

    y = conv_bn(x_nchw, w1_t, s1, b1, 1, True)
    y = conv_bn(y, w2_t, s2, b2, S, True)
    y = conv_bn(y, w3_t, s3, b3, 1, False)
    return y


if __name__ == "__main__":
    N, Cin, H, W = 2, 8, 16, 16
    Cout, K, S = 32, 3, 2               # mid_channels = Cout // 4 = 8

    key = jax.random.PRNGKey(0)
    kx, kp = jax.random.split(key)
    x = jax.random.normal(kx, (N, Cin, H, W), jnp.float32)
    params, torch_w = init_params(kp, Cin, Cout, K)

    y = bagnet_bottleneck_forward(x, params, K, S)
    y = jax.block_until_ready(y)

    y_ref = reference_forward(x, torch_w, params, K, S)
    Hout, Wout = (H - K) // S + 1, (W - K) // S + 1
    assert y.shape == y_ref.shape == (N, Cout, Hout, Wout)
    if not jnp.allclose(y, y_ref, atol=3e-2, rtol=3e-2):
        raise AssertionError(
            "mismatch vs reference, max err %e"
            % float(jnp.max(jnp.abs(y - y_ref))))
    print("KERNEL_OK")
</pallas_src>

<mosaic_0001>
module attributes {stable_mosaic.version = 11 : i64} {
  func.func @_bagnet_bottleneck_kernel(%arg0: i32, %arg1: memref<1x4x8x8x128xbf16, #tpu.memory_space<vmem>>, %arg2: memref<128x128xbf16, #tpu.memory_space<vmem>>, %arg3: memref<1x128xf32, #tpu.memory_space<vmem>>, %arg4: memref<1x128xf32, #tpu.memory_space<vmem>>, %arg5: memref<9x128x128xbf16, #tpu.memory_space<vmem>>, %arg6: memref<1x128xf32, #tpu.memory_space<vmem>>, %arg7: memref<1x128xf32, #tpu.memory_space<vmem>>, %arg8: memref<128x128xbf16, #tpu.memory_space<vmem>>, %arg9: memref<1x128xf32, #tpu.memory_space<vmem>>, %arg10: memref<1x128xf32, #tpu.memory_space<vmem>>, %arg11: memref<1x7x7x128xf32, #tpu.memory_space<vmem>>) attributes {dimension_semantics = [#tpu.dimension_semantics<parallel>], iteration_bounds = array<i64: 2>, scalar_prefetch = 0 : i64, scratch_operands = 0 : i64, tpu.core_type = #tpu.core_type<tc>, window_params = [{transform_indices = @transform_0, window_bounds = array<i64: 1, 4, 8, 8, 128>}, {pipeline_mode = #tpu.pipeline_mode<synchronous>, transform_indices = @transform_1, window_bounds = array<i64: 128, 128>}, {pipeline_mode = #tpu.pipeline_mode<synchronous>, transform_indices = @transform_2, window_bounds = array<i64: 1, 128>}, {pipeline_mode = #tpu.pipeline_mode<synchronous>, transform_indices = @transform_3, window_bounds = array<i64: 1, 128>}, {pipeline_mode = #tpu.pipeline_mode<synchronous>, transform_indices = @transform_4, window_bounds = array<i64: 9, 128, 128>}, {pipeline_mode = #tpu.pipeline_mode<synchronous>, transform_indices = @transform_5, window_bounds = array<i64: 1, 128>}, {pipeline_mode = #tpu.pipeline_mode<synchronous>, transform_indices = @transform_6, window_bounds = array<i64: 1, 128>}, {pipeline_mode = #tpu.pipeline_mode<synchronous>, transform_indices = @transform_7, window_bounds = array<i64: 128, 128>}, {pipeline_mode = #tpu.pipeline_mode<synchronous>, transform_indices = @transform_8, window_bounds = array<i64: 1, 128>}, {pipeline_mode = #tpu.pipeline_mode<synchronous>, transform_indices = @transform_9, window_bounds = array<i64: 1, 128>}, {transform_indices = @transform_10, window_bounds = array<i64: 1, 7, 7, 128>}]} {
    %c0 = arith.constant 0 : index
    %c0_0 = arith.constant 0 : index
    %c0_1 = arith.constant 0 : index
    %c0_2 = arith.constant 0 : index
    %c0_3 = arith.constant 0 : index
    %0 = vector.load %arg1[%c0, %c0_0, %c0_1, %c0_2, %c0_3] : memref<1x4x8x8x128xbf16, #tpu.memory_space<vmem>>, vector<1x4x8x8x128xbf16>
    %1 = vector.shape_cast %0 : vector<1x4x8x8x128xbf16> to vector<4x8x8x128xbf16>
    %2 = vector.shape_cast %1 : vector<4x8x8x128xbf16> to vector<256x128xbf16>
    %c0_4 = arith.constant 0 : index
    %c0_5 = arith.constant 0 : index
    %3 = vector.load %arg2[%c0_4, %c0_5] : memref<128x128xbf16, #tpu.memory_space<vmem>>, vector<128x128xbf16>
    %cst = arith.constant dense<0.000000e+00> : vector<256x128xf32>
    %4 = tpu.matmul %2, %3, %cst {dimension_numbers = #tpu.dot_dimension_numbers<[1], [0], [0], [1], [0, 0, 1, 1], [], []>} : vector<256x128xbf16>, vector<128x128xbf16>, vector<256x128xf32> -> vector<256x128xf32>
    %c0_6 = arith.constant 0 : index
    %c0_7 = arith.constant 0 : index
    %5 = vector.load %arg3[%c0_6, %c0_7] : memref<1x128xf32, #tpu.memory_space<vmem>>, vector<1x128xf32>
    %6 = vector.broadcast %5 : vector<1x128xf32> to vector<256x128xf32>
    %7 = arith.mulf %4, %6 : vector<256x128xf32>
    %c0_8 = arith.constant 0 : index
    %c0_9 = arith.constant 0 : index
    %8 = vector.load %arg4[%c0_8, %c0_9] : memref<1x128xf32, #tpu.memory_space<vmem>>, vector<1x128xf32>
    %9 = vector.broadcast %8 : vector<1x128xf32> to vector<256x128xf32>
    %10 = arith.addf %7, %9 : vector<256x128xf32>
    %cst_10 = arith.constant 0.000000e+00 : f32
    %11 = vector.broadcast %cst_10 : f32 to vector<256x128xf32>
    %12 = arith.maximumf %10, %11 : vector<256x128xf32>
    %13 = arith.truncf %12 : vector<256x128xf32> to vector<256x128xbf16>
    %14 = vector.shape_cast %13 : vector<256x128xbf16> to vector<4x8x8x128xbf16>
    %cst_11 = arith.constant 0.000000e+00 : bf16
    %15 = vector.broadcast %cst_11 : bf16 to vector<4x8x1x128xbf16>
    %16 = vector.extract_strided_slice %14 {offsets = [0, 0, 1, 0], sizes = [4, 8, 7, 128], strides = [1, 1, 1, 1]} : vector<4x8x8x128xbf16> to vector<4x8x7x128xbf16>
    %17 = tpu.concatenate %16, %15 in 2 : vector<4x8x7x128xbf16>, vector<4x8x1x128xbf16> -> vector<4x8x8x128xbf16>
    %cst_12 = arith.constant 0.000000e+00 : f32
    %18 = vector.broadcast %cst_12 : f32 to vector<56x128xf32>
    %19 = vector.extract_strided_slice %14 {offsets = [0, 0, 0, 0], sizes = [1, 7, 8, 128], strides = [1, 1, 1, 1]} : vector<4x8x8x128xbf16> to vector<1x7x8x128xbf16>
    %20 = vector.shape_cast %19 : vector<1x7x8x128xbf16> to vector<7x8x128xbf16>
    %21 = vector.shape_cast %20 : vector<7x8x128xbf16> to vector<56x128xbf16>
    %c0_13 = arith.constant 0 : index
    %c0_14 = arith.constant 0 : index
    %c0_15 = arith.constant 0 : index
    %22 = vector.load %arg5[%c0_13, %c0_14, %c0_15] : memref<9x128x128xbf16, #tpu.memory_space<vmem>>, vector<1x128x128xbf16>
    %23 = vector.shape_cast %22 : vector<1x128x128xbf16> to vector<128x128xbf16>
    %cst_16 = arith.constant dense<0.000000e+00> : vector<56x128xf32>
    %24 = tpu.matmul %21, %23, %cst_16 {dimension_numbers = #tpu.dot_dimension_numbers<[1], [0], [0], [1], [0, 0, 1, 1], [], []>} : vector<56x128xbf16>, vector<128x128xbf16>, vector<56x128xf32> -> vector<56x128xf32>
    %25 = arith.addf %18, %24 : vector<56x128xf32>
    %26 = vector.extract_strided_slice %14 {offsets = [1, 0, 0, 0], sizes = [1, 7, 8, 128], strides = [1, 1, 1, 1]} : vector<4x8x8x128xbf16> to vector<1x7x8x128xbf16>
    %27 = vector.shape_cast %26 : vector<1x7x8x128xbf16> to vector<7x8x128xbf16>
    %28 = vector.shape_cast %27 : vector<7x8x128xbf16> to vector<56x128xbf16>
    %c1 = arith.constant 1 : index
    %c0_17 = arith.constant 0 : index
    %c0_18 = arith.constant 0 : index
    %29 = vector.load %arg5[%c1, %c0_17, %c0_18] : memref<9x128x128xbf16, #tpu.memory_space<vmem>>, vector<1x128x128xbf16>
    %30 = vector.shape_cast %29 : vector<1x128x128xbf16> to vector<128x128xbf16>
    %cst_19 = arith.constant dense<0.000000e+00> : vector<56x128xf32>
    %31 = tpu.matmul %28, %30, %cst_19 {dimension_numbers = #tpu.dot_dimension_numbers<[1], [0], [0], [1], [0, 0, 1, 1], [], []>} : vector<56x128xbf16>, vector<128x128xbf16>, vector<56x128xf32> -> vector<56x128xf32>
    %32 = arith.addf %25, %31 : vector<56x128xf32>
    %33 = vector.extract_strided_slice %17 {offsets = [0, 0, 0, 0], sizes = [1, 7, 8, 128], strides = [1, 1, 1, 1]} : vector<4x8x8x128xbf16> to vector<1x7x8x128xbf16>
    %34 = vector.shape_cast %33 : vector<1x7x8x128xbf16> to vector<7x8x128xbf16>
    %35 = vector.shape_cast %34 : vector<7x8x128xbf16> to vector<56x128xbf16>
    %c2 = arith.constant 2 : index
    %c0_20 = arith.constant 0 : index
    %c0_21 = arith.constant 0 : index
    %36 = vector.load %arg5[%c2, %c0_20, %c0_21] : memref<9x128x128xbf16, #tpu.memory_space<vmem>>, vector<1x128x128xbf16>
    %37 = vector.shape_cast %36 : vector<1x128x128xbf16> to vector<128x128xbf16>
    %cst_22 = arith.constant dense<0.000000e+00> : vector<56x128xf32>
    %38 = tpu.matmul %35, %37, %cst_22 {dimension_numbers = #tpu.dot_dimension_numbers<[1], [0], [0], [1], [0, 0, 1, 1], [], []>} : vector<56x128xbf16>, vector<128x128xbf16>, vector<56x128xf32> -> vector<56x128xf32>
    %39 = arith.addf %32, %38 : vector<56x128xf32>
    %40 = vector.extract_strided_slice %14 {offsets = [2, 0, 0, 0], sizes = [1, 7, 8, 128], strides = [1, 1, 1, 1]} : vector<4x8x8x128xbf16> to vector<1x7x8x128xbf16>
    %41 = vector.shape_cast %40 : vector<1x7x8x128xbf16> to vector<7x8x128xbf16>
    %42 = vector.shape_cast %41 : vector<7x8x128xbf16> to vector<56x128xbf16>
    %c3 = arith.constant 3 : index
    %c0_23 = arith.constant 0 : index
    %c0_24 = arith.constant 0 : index
    %43 = vector.load %arg5[%c3, %c0_23, %c0_24] : memref<9x128x128xbf16, #tpu.memory_space<vmem>>, vector<1x128x128xbf16>
    %44 = vector.shape_cast %43 : vector<1x128x128xbf16> to vector<128x128xbf16>
    %cst_25 = arith.constant dense<0.000000e+00> : vector<56x128xf32>
    %45 = tpu.matmul %42, %44, %cst_25 {dimension_numbers = #tpu.dot_dimension_numbers<[1], [0], [0], [1], [0, 0, 1, 1], [], []>} : vector<56x128xbf16>, vector<128x128xbf16>, vector<56x128xf32> -> vector<56x128xf32>
    %46 = arith.addf %39, %45 : vector<56x128xf32>
    %47 = vector.extract_strided_slice %14 {offsets = [3, 0, 0, 0], sizes = [1, 7, 8, 128], strides = [1, 1, 1, 1]} : vector<4x8x8x128xbf16> to vector<1x7x8x128xbf16>
    %48 = vector.shape_cast %47 : vector<1x7x8x128xbf16> to vector<7x8x128xbf16>
    %49 = vector.shape_cast %48 : vector<7x8x128xbf16> to vector<56x128xbf16>
    %c4 = arith.constant 4 : index
    %c0_26 = arith.constant 0 : index
    %c0_27 = arith.constant 0 : index
    %50 = vector.load %arg5[%c4, %c0_26, %c0_27] : memref<9x128x128xbf16, #tpu.memory_space<vmem>>, vector<1x128x128xbf16>
    %51 = vector.shape_cast %50 : vector<1x128x128xbf16> to vector<128x128xbf16>
    %cst_28 = arith.constant dense<0.000000e+00> : vector<56x128xf32>
    %52 = tpu.matmul %49, %51, %cst_28 {dimension_numbers = #tpu.dot_dimension_numbers<[1], [0], [0], [1], [0, 0, 1, 1], [], []>} : vector<56x128xbf16>, vector<128x128xbf16>, vector<56x128xf32> -> vector<56x128xf32>
    %53 = arith.addf %46, %52 : vector<56x128xf32>
    %54 = vector.extract_strided_slice %17 {offsets = [2, 0, 0, 0], sizes = [1, 7, 8, 128], strides = [1, 1, 1, 1]} : vector<4x8x8x128xbf16> to vector<1x7x8x128xbf16>
    %55 = vector.shape_cast %54 : vector<1x7x8x128xbf16> to vector<7x8x128xbf16>
    %56 = vector.shape_cast %55 : vector<7x8x128xbf16> to vector<56x128xbf16>
    %c5 = arith.constant 5 : index
    %c0_29 = arith.constant 0 : index
    %c0_30 = arith.constant 0 : index
    %57 = vector.load %arg5[%c5, %c0_29, %c0_30] : memref<9x128x128xbf16, #tpu.memory_space<vmem>>, vector<1x128x128xbf16>
    %58 = vector.shape_cast %57 : vector<1x128x128xbf16> to vector<128x128xbf16>
    %cst_31 = arith.constant dense<0.000000e+00> : vector<56x128xf32>
    %59 = tpu.matmul %56, %58, %cst_31 {dimension_numbers = #tpu.dot_dimension_numbers<[1], [0], [0], [1], [0, 0, 1, 1], [], []>} : vector<56x128xbf16>, vector<128x128xbf16>, vector<56x128xf32> -> vector<56x128xf32>
    %60 = arith.addf %53, %59 : vector<56x128xf32>
    %61 = vector.extract_strided_slice %14 {offsets = [0, 1, 0, 0], sizes = [1, 7, 8, 128], strides = [1, 1, 1, 1]} : vector<4x8x8x128xbf16> to vector<1x7x8x128xbf16>
    %62 = vector.shape_cast %61 : vector<1x7x8x128xbf16> to vector<7x8x128xbf16>
    %63 = vector.shape_cast %62 : vector<7x8x128xbf16> to vector<56x128xbf16>
    %c6 = arith.constant 6 : index
    %c0_32 = arith.constant 0 : index
    %c0_33 = arith.constant 0 : index
    %64 = vector.load %arg5[%c6, %c0_32, %c0_33] : memref<9x128x128xbf16, #tpu.memory_space<vmem>>, vector<1x128x128xbf16>
    %65 = vector.shape_cast %64 : vector<1x128x128xbf16> to vector<128x128xbf16>
    %cst_34 = arith.constant dense<0.000000e+00> : vector<56x128xf32>
    %66 = tpu.matmul %63, %65, %cst_34 {dimension_numbers = #tpu.dot_dimension_numbers<[1], [0], [0], [1], [0, 0, 1, 1], [], []>} : vector<56x128xbf16>, vector<128x128xbf16>, vector<56x128xf32> -> vector<56x128xf32>
    %67 = arith.addf %60, %66 : vector<56x128xf32>
    %68 = vector.extract_strided_slice %14 {offsets = [1, 1, 0, 0], sizes = [1, 7, 8, 128], strides = [1, 1, 1, 1]} : vector<4x8x8x128xbf16> to vector<1x7x8x128xbf16>
    %69 = vector.shape_cast %68 : vector<1x7x8x128xbf16> to vector<7x8x128xbf16>
    %70 = vector.shape_cast %69 : vector<7x8x128xbf16> to vector<56x128xbf16>
    %c7 = arith.constant 7 : index
    %c0_35 = arith.constant 0 : index
    %c0_36 = arith.constant 0 : index
    %71 = vector.load %arg5[%c7, %c0_35, %c0_36] : memref<9x128x128xbf16, #tpu.memory_space<vmem>>, vector<1x128x128xbf16>
    %72 = vector.shape_cast %71 : vector<1x128x128xbf16> to vector<128x128xbf16>
    %cst_37 = arith.constant dense<0.000000e+00> : vector<56x128xf32>
    %73 = tpu.matmul %70, %72, %cst_37 {dimension_numbers = #tpu.dot_dimension_numbers<[1], [0], [0], [1], [0, 0, 1, 1], [], []>} : vector<56x128xbf16>, vector<128x128xbf16>, vector<56x128xf32> -> vector<56x128xf32>
    %74 = arith.addf %67, %73 : vector<56x128xf32>
    %75 = vector.extract_strided_slice %17 {offsets = [0, 1, 0, 0], sizes = [1, 7, 8, 128], strides = [1, 1, 1, 1]} : vector<4x8x8x128xbf16> to vector<1x7x8x128xbf16>
    %76 = vector.shape_cast %75 : vector<1x7x8x128xbf16> to vector<7x8x128xbf16>
    %77 = vector.shape_cast %76 : vector<7x8x128xbf16> to vector<56x128xbf16>
    %c8 = arith.constant 8 : index
    %c0_38 = arith.constant 0 : index
    %c0_39 = arith.constant 0 : index
    %78 = vector.load %arg5[%c8, %c0_38, %c0_39] : memref<9x128x128xbf16, #tpu.memory_space<vmem>>, vector<1x128x128xbf16>
    %79 = vector.shape_cast %78 : vector<1x128x128xbf16> to vector<128x128xbf16>
    %cst_40 = arith.constant dense<0.000000e+00> : vector<56x128xf32>
    %80 = tpu.matmul %77, %79, %cst_40 {dimension_numbers = #tpu.dot_dimension_numbers<[1], [0], [0], [1], [0, 0, 1, 1], [], []>} : vector<56x128xbf16>, vector<128x128xbf16>, vector<56x128xf32> -> vector<56x128xf32>
    %81 = arith.addf %74, %80 : vector<56x128xf32>
    %c0_41 = arith.constant 0 : index
    %c0_42 = arith.constant 0 : index
    %82 = vector.load %arg6[%c0_41, %c0_42] : memref<1x128xf32, #tpu.memory_space<vmem>>, vector<1x128xf32>
    %83 = vector.broadcast %82 : vector<1x128xf32> to vector<56x128xf32>
    %84 = arith.mulf %81, %83 : vector<56x128xf32>
    %c0_43 = arith.constant 0 : index
    %c0_44 = arith.constant 0 : index
    %85 = vector.load %arg7[%c0_43, %c0_44] : memref<1x128xf32, #tpu.memory_space<vmem>>, vector<1x128xf32>
    %86 = vector.broadcast %85 : vector<1x128xf32> to vector<56x128xf32>
    %87 = arith.addf %84, %86 : vector<56x128xf32>
    %cst_45 = arith.constant 0.000000e+00 : f32
    %88 = vector.broadcast %cst_45 : f32 to vector<56x128xf32>
    %89 = arith.maximumf %87, %88 : vector<56x128xf32>
    %90 = arith.truncf %89 : vector<56x128xf32> to vector<56x128xbf16>
    %c0_46 = arith.constant 0 : index
    %c0_47 = arith.constant 0 : index
    %91 = vector.load %arg8[%c0_46, %c0_47] : memref<128x128xbf16, #tpu.memory_space<vmem>>, vector<128x128xbf16>
    %cst_48 = arith.constant dense<0.000000e+00> : vector<56x128xf32>
    %92 = tpu.matmul %90, %91, %cst_48 {dimension_numbers = #tpu.dot_dimension_numbers<[1], [0], [0], [1], [0, 0, 1, 1], [], []>} : vector<56x128xbf16>, vector<128x128xbf16>, vector<56x128xf32> -> vector<56x128xf32>
    %c0_49 = arith.constant 0 : index
    %c0_50 = arith.constant 0 : index
    %93 = vector.load %arg9[%c0_49, %c0_50] : memref<1x128xf32, #tpu.memory_space<vmem>>, vector<1x128xf32>
    %94 = vector.broadcast %93 : vector<1x128xf32> to vector<56x128xf32>
    %95 = arith.mulf %92, %94 : vector<56x128xf32>
    %c0_51 = arith.constant 0 : index
    %c0_52 = arith.constant 0 : index
    %96 = vector.load %arg10[%c0_51, %c0_52] : memref<1x128xf32, #tpu.memory_space<vmem>>, vector<1x128xf32>
    %97 = vector.broadcast %96 : vector<1x128xf32> to vector<56x128xf32>
    %98 = arith.addf %95, %97 : vector<56x128xf32>
    %99 = vector.shape_cast %98 : vector<56x128xf32> to vector<7x8x128xf32>
    %100 = vector.extract_strided_slice %99 {offsets = [0, 0, 0], sizes = [7, 7, 128], strides = [1, 1, 1]} : vector<7x8x128xf32> to vector<7x7x128xf32>
    %c0_53 = arith.constant 0 : index
    %c0_54 = arith.constant 0 : index
    %c0_55 = arith.constant 0 : index
    %c0_56 = arith.constant 0 : index
    %101 = vector.load %arg11[%c0_53, %c0_54, %c0_55, %c0_56] : memref<1x7x7x128xf32, #tpu.memory_space<vmem>>, vector<1x7x7x128xf32>
    %102 = vector.shape_cast %101 : vector<1x7x7x128xf32> to vector<7x7x128xf32>
    %103 = vector.shape_cast %100 : vector<7x7x128xf32> to vector<1x7x7x128xf32>
    tpu.vector_store %arg11[%c0_53, %c0_54, %c0_55, %c0_56], %103 {strides = array<i32>} : memref<1x7x7x128xf32, #tpu.memory_space<vmem>>, vector<1x7x7x128xf32>,
    return
  }
  func.func @transform_0(%arg0: i32) -> (i32, i32, i32, i32, i32) {
    %c0_i32 = arith.constant 0 : i32
    %c0_i32_0 = arith.constant 0 : i32
    %c0_i32_1 = arith.constant 0 : i32
    %c0_i32_2 = arith.constant 0 : i32
    %c0_i32_3 = arith.constant 0 : i32
    return %arg0, %c0_i32, %c0_i32_0, %c0_i32_1, %c0_i32_2 : i32, i32, i32, i32, i32
  }
  func.func @transform_1(%arg0: i32) -> (i32, i32) {
    %c0_i32 = arith.constant 0 : i32
    %c0_i32_0 = arith.constant 0 : i32
    %c0_i32_1 = arith.constant 0 : i32
    return %c0_i32, %c0_i32_0 : i32, i32
  }
  func.func @transform_2(%arg0: i32) -> (i32, i32) {
    %c0_i32 = arith.constant 0 : i32
    %c0_i32_0 = arith.constant 0 : i32
    %c0_i32_1 = arith.constant 0 : i32
    return %c0_i32, %c0_i32_0 : i32, i32
  }
  func.func @transform_3(%arg0: i32) -> (i32, i32) {
    %c0_i32 = arith.constant 0 : i32
    %c0_i32_0 = arith.constant 0 : i32
    %c0_i32_1 = arith.constant 0 : i32
    return %c0_i32, %c0_i32_0 : i32, i32
  }
  func.func @transform_4(%arg0: i32) -> (i32, i32, i32) {
    %c0_i32 = arith.constant 0 : i32
    %c0_i32_0 = arith.constant 0 : i32
    %c0_i32_1 = arith.constant 0 : i32
    %c0_i32_2 = arith.constant 0 : i32
    return %c0_i32, %c0_i32_0, %c0_i32_1 : i32, i32, i32
  }
  func.func @transform_5(%arg0: i32) -> (i32, i32) {
    %c0_i32 = arith.constant 0 : i32
    %c0_i32_0 = arith.constant 0 : i32
    %c0_i32_1 = arith.constant 0 : i32
    return %c0_i32, %c0_i32_0 : i32, i32
  }
  func.func @transform_6(%arg0: i32) -> (i32, i32) {
    %c0_i32 = arith.constant 0 : i32
    %c0_i32_0 = arith.constant 0 : i32
    %c0_i32_1 = arith.constant 0 : i32
    return %c0_i32, %c0_i32_0 : i32, i32
  }
  func.func @transform_7(%arg0: i32) -> (i32, i32) {
    %c0_i32 = arith.constant 0 : i32
    %c0_i32_0 = arith.constant 0 : i32
    %c0_i32_1 = arith.constant 0 : i32
    return %c0_i32, %c0_i32_0 : i32, i32
  }
  func.func @transform_8(%arg0: i32) -> (i32, i32) {
    %c0_i32 = arith.constant 0 : i32
    %c0_i32_0 = arith.constant 0 : i32
    %c0_i32_1 = arith.constant 0 : i32
    return %c0_i32, %c0_i32_0 : i32, i32
  }
  func.func @transform_9(%arg0: i32) -> (i32, i32) {
    %c0_i32 = arith.constant 0 : i32
    %c0_i32_0 = arith.constant 0 : i32
    %c0_i32_1 = arith.constant 0 : i32
    return %c0_i32, %c0_i32_0 : i32, i32
  }
  func.func @transform_10(%arg0: i32) -> (i32, i32, i32, i32) {
    %c0_i32 = arith.constant 0 : i32
    %c0_i32_0 = arith.constant 0 : i32
    %c0_i32_1 = arith.constant 0 : i32
    %c0_i32_2 = arith.constant 0 : i32
    return %arg0, %c0_i32, %c0_i32_0, %c0_i32_1 : i32, i32, i32, i32
  }
}

</mosaic_0001>

<llo_original>
// kernel: tpu_custom_call.1
$region0: #{tpu_custom_call.1}
  #allocation0 [shape = 'u32[]', space=smem, size = 0x4, offset = 0x4, fixed_abs, tag = 'smem constant byte address 0x4 - core index']
  #allocation1 [shape = 'u32[144,128]{1,0:T(1,128)}', space=vmem, size = 0x12000, scoped, tag = 'internal scratch']
  %s0 = inlined_call_operand.hbm [shape: bf16[2,4,8,8,128], index: 0, kind: input, shape index: {}]
  %s1 = inlined_call_operand.hbm [shape: bf16[128,128], index: 1, kind: input, shape index: {}]
  %s2 = inlined_call_operand.vmem [shape: f32[1,128], index: 2, kind: input, shape index: {}]
  %s3 = inlined_call_operand.vmem [shape: f32[1,128], index: 3, kind: input, shape index: {}]
  %s4 = inlined_call_operand.hbm [shape: bf16[9,128,128], index: 4, kind: input, shape index: {}]
  %s5 = inlined_call_operand.vmem [shape: f32[1,128], index: 5, kind: input, shape index: {}]
  %s6 = inlined_call_operand.vmem [shape: f32[1,128], index: 6, kind: input, shape index: {}]
  %s7 = inlined_call_operand.hbm [shape: bf16[128,128], index: 7, kind: input, shape index: {}]
  %s8 = inlined_call_operand.vmem [shape: f32[1,128], index: 8, kind: input, shape index: {}]
  %s9 = inlined_call_operand.vmem [shape: f32[1,128], index: 9, kind: input, shape index: {}]
  %s10 = inlined_call_operand.vmem [shape: f32[2,7,7,128], index: 10, kind: output, shape index: {}]
  %s11 = sld [smem:[#allocation0]]
  $region89: #{tpu_custom_call.1} parent=0
    _
  %s13 = ssub.s32 1, %s11
  %s14 = scalar_select 0, %s13, %s11
  $region1: #{tpu_custom_call.1} parent=0
    #allocation2 [shape = 'u8[131072]{0}', space=vmem, size = 0x20000, scoped, tag = 'input window, operand 0']
    #allocation3 [shape = 's32[2]{0}', space=sflag, size = 0x8, scoped, tag = 'scoped memory for tpu_custom_call.1']
    #allocation4 [shape = 'u8[32768]{0}', space=vmem, size = 0x8000, scoped, tag = 'input window, operand 1, single buffered']
    #allocation5 [shape = 's32[1]{0}', space=sflag, size = 0x4, scoped, tag = 'scoped memory for tpu_custom_call.1']
    #allocation6 [shape = 'u8[294912]{0}', space=vmem, size = 0x48000, scoped, tag = 'input window, operand 4, single buffered']
    #allocation7 [shape = 'u8[32768]{0}', space=vmem, size = 0x8000, scoped, tag = 'input window, operand 7, single buffered']
    #allocation8 [shape = 's32[1]{0}', space=sflag, size = 0x4, scoped, tag = 'scoped memory for tpu_custom_call.1']
    %15 = vsyncpa [#allocation3], 0
    %s16 = scalar_lea.sflag [#allocation3], 1
    %17 = vsyncpa %s16, 0
    %18 = vsyncpa [#allocation5], 0
    %19 = vsyncpa [#allocation8], 0
    loop: start=0, step=1, limit=4
    $region2: #{tpu_custom_call.1} parent=1 // loop_pre_header
      _
    $region3: #{tpu_custom_call.1} parent=1 // loop_header
      %s21 = sphi 0, %s25
      %p22 = scmp.ge.s32.totalorder %s21, 4
      %s31 = sphi 0, %s33
      %s34 = sphi 0, %s31
      %s35 = sphi 0, %s34
      %s51 = sphi 0, %s35
      %s55 = sphi 0, %s55
      %s57 = sphi 0, %s55
      %s58 = sphi 0, %s57
      %s72 = sphi 0, %s58
      %s76 = sphi 0, %s76
      %s78 = sphi 0, %s76
      %s79 = sphi 0, %s78
      %s93 = sphi 0, %s79
      %s97 = sphi 0, %s97
      %s99 = sphi 0, %s97
      %s100 = sphi 0, %s99
      %s114 = sphi 0, %s100
      %s118 = sphi 0, %s118
      %s120 = sphi 0, %s118
      %s121 = sphi 0, %s120
      %s135 = sphi 0, %s121
      %s139 = sphi 0, %s139
      %s141 = sphi 0, %s139
      %s142 = sphi 0, %s141
      %s156 = sphi 0, %s142
      %s160 = sphi 0, %s160
      %s162 = sphi 0, %s160
      %s163 = sphi 0, %s162
      %s177 = sphi 0, %s163
      %s181 = sphi 0, %s181
      %s183 = sphi 0, %s181
      %s184 = sphi 0, %s183
      %s198 = sphi 0, %s184
      %s202 = sphi 0, %s202
      %s204 = sphi 0, %s202
      %s205 = sphi 0, %s204
      %s219 = sphi 0, %s205
      %s223 = sphi 0, %s223
      %s225 = sphi 0, %s223
      %s226 = sphi 0, %s225
      %s240 = sphi 0, %s226
      %s246 = sphi 0, %s248
      %s249 = sphi 0, %s246
      %s250 = sphi 0, %s249
      %s266 = sphi 0, %s250
    $region4: #{tpu_custom_call.1} parent=1 // loop_header_branch
      %24 = sbr.rel (%p22) target = $region8
    $region5: #{tpu_custom_call.1} parent=1 // loop_body
      %s26 = ssub.s32 %s21, 1
      %s27 = ssub.s32 %s21, 2
      %s28 = sadd.s32 %s21, 1
      %s29 = ssub.s32 %s21, %s28
      %p30 = scmp.eq.s32.totalorder %s29, 0
      %s32 = sadd.s32 %s31, 1
      %s33 = scalar_select %p30, %s31, %s32
      %p36 = pneg %p30
      %p37 = scmp.eq.s32.totalorder %s21, 1
      %p38 = por %p36, %p37
      %p39 = scmp.ne.s32.totalorder %s31, %s34
      %p40 = scmp.eq.s32.totalorder %s21, 0
      %p41 = por %p39, %p40
      %p42 = scmp.ne.s32.totalorder %s31, %s34
      %p43 = scmp.eq.s32.totalorder %s26, 1
      %p44 = por %p42, %p43
      %p45 = scmp.ne.s32.totalorder %s34, %s35
      %p46 = scmp.eq.s32.totalorder %s26, 0
      %p47 = por %p45, %p46
      %p48 = scmp.ne.s32.totalorder %s34, %s35
      %p49 = scmp.eq.s32.totalorder %s27, 1
      %p50 = por %p48, %p49
      %p52 = scmp.ne.s32.totalorder %s35, %s51
      %p53 = scmp.eq.s32.totalorder %s27, 0
      %p54 = por %p52, %p53
      %s56 = sadd.s32 %s55, 1
      %p59 = scmp.eq.s32.totalorder %s21, 1
      %p60 = scmp.ne.s32.totalorder %s55, %s57
      %p61 = scmp.eq.s32.totalorder %s21, 0
      %p62 = por %p60, %p61
      %p63 = scmp.ne.s32.totalorder %s55, %s57
      %p64 = scmp.eq.s32.totalorder %s26, 1
      %p65 = por %p63, %p64
      %p66 = scmp.ne.s32.totalorder %s57, %s58
      %p67 = scmp.eq.s32.totalorder %s26, 0
      %p68 = por %p66, %p67
      %p69 = scmp.ne.s32.totalorder %s57, %s58
      %p70 = scmp.eq.s32.totalorder %s27, 1
      %p71 = por %p69, %p70
      %p73 = scmp.ne.s32.totalorder %s58, %s72
      %p74 = scmp.eq.s32.totalorder %s27, 0
      %p75 = por %p73, %p74
      %s77 = sadd.s32 %s76, 1
      %p80 = scmp.eq.s32.totalorder %s21, 1
      %p81 = scmp.ne.s32.totalorder %s76, %s78
      %p82 = scmp.eq.s32.totalorder %s21, 0
      %p83 = por %p81, %p82
      %p84 = scmp.ne.s32.totalorder %s76, %s78
      %p85 = scmp.eq.s32.totalorder %s26, 1
      %p86 = por %p84, %p85
      %p87 = scmp.ne.s32.totalorder %s78, %s79
      %p88 = scmp.eq.s32.totalorder %s26, 0
      %p89 = por %p87, %p88
      %p90 = scmp.ne.s32.totalorder %s78, %s79
      %p91 = scmp.eq.s32.totalorder %s27, 1
      %p92 = por %p90, %p91
      %p94 = scmp.ne.s32.totalorder %s79, %s93
      %p95 = scmp.eq.s32.totalorder %s27, 0
      %p96 = por %p94, %p95
      %s98 = sadd.s32 %s97, 1
      %p101 = scmp.eq.s32.totalorder %s21, 1
      %p102 = scmp.ne.s32.totalorder %s97, %s99
      %p103 = scmp.eq.s32.totalorder %s21, 0
      %p104 = por %p102, %p103
      %p105 = scmp.ne.s32.totalorder %s97, %s99
      %p106 = scmp.eq.s32.totalorder %s26, 1
      %p107 = por %p105, %p106
      %p108 = scmp.ne.s32.totalorder %s99, %s100
      %p109 = scmp.eq.s32.totalorder %s26, 0
      %p110 = por %p108, %p109
      %p111 = scmp.ne.s32.totalorder %s99, %s100
      %p112 = scmp.eq.s32.totalorder %s27, 1
      %p113 = por %p111, %p112
      %p115 = scmp.ne.s32.totalorder %s100, %s114
      %p116 = scmp.eq.s32.totalorder %s27, 0
      %p117 = por %p115, %p116
      %s119 = sadd.s32 %s118, 1
      %p122 = scmp.eq.s32.totalorder %s21, 1
      %p123 = scmp.ne.s32.totalorder %s118, %s120
      %p124 = scmp.eq.s32.totalorder %s21, 0
      %p125 = por %p123, %p124
      %p126 = scmp.ne.s32.totalorder %s118, %s120
      %p127 = scmp.eq.s32.totalorder %s26, 1
      %p128 = por %p126, %p127
      %p129 = scmp.ne.s32.totalorder %s120, %s121
      %p130 = scmp.eq.s32.totalorder %s26, 0
      %p131 = por %p129, %p130
      %p132 = scmp.ne.s32.totalorder %s120, %s121
      %p133 = scmp.eq.s32.totalorder %s27, 1
      %p134 = por %p132, %p133
      %p136 = scmp.ne.s32.totalorder %s121, %s135
      %p137 = scmp.eq.s32.totalorder %s27, 0
      %p138 = por %p136, %p137
      %s140 = sadd.s32 %s139, 1
      %p143 = scmp.eq.s32.totalorder %s21, 1
      %p144 = scmp.ne.s32.totalorder %s139, %s141
      %p145 = scmp.eq.s32.totalorder %s21, 0
      %p146 = por %p144, %p145
      %p147 = scmp.ne.s32.totalorder %s139, %s141
      %p148 = scmp.eq.s32.totalorder %s26, 1
      %p149 = por %p147, %p148
      %p150 = scmp.ne.s32.totalorder %s141, %s142
      %p151 = scmp.eq.s32.totalorder %s26, 0
      %p152 = por %p150, %p151
      %p153 = scmp.ne.s32.totalorder %s141, %s142
      %p154 = scmp.eq.s32.totalorder %s27, 1
      %p155 = por %p153, %p154
      %p157 = scmp.ne.s32.totalorder %s142, %s156
      %p158 = scmp.eq.s32.totalorder %s27, 0
      %p159 = por %p157, %p158
      %s161 = sadd.s32 %s160, 1
      %p164 = scmp.eq.s32.totalorder %s21, 1
      %p165 = scmp.ne.s32.totalorder %s160, %s162
      %p166 = scmp.eq.s32.totalorder %s21, 0
      %p167 = por %p165, %p166
      %p168 = scmp.ne.s32.totalorder %s160, %s162
      %p169 = scmp.eq.s32.totalorder %s26, 1
      %p170 = por %p168, %p169
      %p171 = scmp.ne.s32.totalorder %s162, %s163
      %p172 = scmp.eq.s32.totalorder %s26, 0
      %p173 = por %p171, %p172
      %p174 = scmp.ne.s32.totalorder %s162, %s163
      %p175 = scmp.eq.s32.totalorder %s27, 1
      %p176 = por %p174, %p175
      %p178 = scmp.ne.s32.totalorder %s163, %s177
      %p179 = scmp.eq.s32.totalorder %s27, 0
      %p180 = por %p178, %p179
      %s182 = sadd.s32 %s181, 1
      %p185 = scmp.eq.s32.totalorder %s21, 1
      %p186 = scmp.ne.s32.totalorder %s181, %s183
      %p187 = scmp.eq.s32.totalorder %s21, 0
      %p188 = por %p186, %p187
      %p189 = scmp.ne.s32.totalorder %s181, %s183
      %p190 = scmp.eq.s32.totalorder %s26, 1
      %p191 = por %p189, %p190
      %p192 = scmp.ne.s32.totalorder %s183, %s184
      %p193 = scmp.eq.s32.totalorder %s26, 0
      %p194 = por %p192, %p193
      %p195 = scmp.ne.s32.totalorder %s183, %s184
      %p196 = scmp.eq.s32.totalorder %s27, 1
      %p197 = por %p195, %p196
      %p199 = scmp.ne.s32.totalorder %s184, %s198
      %p200 = scmp.eq.s32.totalorder %s27, 0
      %p201 = por %p199, %p200
      %s203 = sadd.s32 %s202, 1
      %p206 = scmp.eq.s32.totalorder %s21, 1
      %p207 = scmp.ne.s32.totalorder %s202, %s204
      %p208 = scmp.eq.s32.totalorder %s21, 0
      %p209 = por %p207, %p208
      %p210 = scmp.ne.s32.totalorder %s202, %s204
      %p211 = scmp.eq.s32.totalorder %s26, 1
      %p212 = por %p210, %p211
      %p213 = scmp.ne.s32.totalorder %s204, %s205
      %p214 = scmp.eq.s32.totalorder %s26, 0
      %p215 = por %p213, %p214
      %p216 = scmp.ne.s32.totalorder %s204, %s205
      %p217 = scmp.eq.s32.totalorder %s27, 1
      %p218 = por %p216, %p217
      %p220 = scmp.ne.s32.totalorder %s205, %s219
      %p221 = scmp.eq.s32.totalorder %s27, 0
      %p222 = por %p220, %p221
      %s224 = sadd.s32 %s223, 1
      %p227 = scmp.eq.s32.totalorder %s21, 1
      %p228 = scmp.ne.s32.totalorder %s223, %s225
      %p229 = scmp.eq.s32.totalorder %s21, 0
      %p230 = por %p228, %p229
      %p231 = scmp.ne.s32.totalorder %s223, %s225
      %p232 = scmp.eq.s32.totalorder %s26, 1
      %p233 = por %p231, %p232
      %p234 = scmp.ne.s32.totalorder %s225, %s226
      %p235 = scmp.eq.s32.totalorder %s26, 0
      %p236 = por %p234, %p235
      %p237 = scmp.ne.s32.totalorder %s225, %s226
      %p238 = scmp.eq.s32.totalorder %s27, 1
      %p239 = por %p237, %p238
      %p241 = scmp.ne.s32.totalorder %s226, %s240
      %p242 = scmp.eq.s32.totalorder %s27, 0
      %p243 = por %p241, %p242
      %s244 = ssub.s32 %s21, %s28
      %p245 = scmp.eq.s32.totalorder %s244, 0
      %s247 = sadd.s32 %s246, 1
      %s248 = scalar_select %p245, %s246, %s247
      %p251 = pneg %p245
      %p252 = scmp.eq.s32.totalorder %s21, 1
      %p253 = por %p251, %p252
      %p254 = scmp.ne.s32.totalorder %s246, %s249
      %p255 = scmp.eq.s32.totalorder %s21, 0
      %p256 = por %p254, %p255
      %p257 = scmp.ne.s32.totalorder %s246, %s249
      %p258 = scmp.eq.s32.totalorder %s26, 1
      %p259 = por %p257, %p258
      %p260 = scmp.ne.s32.totalorder %s249, %s250
      %p261 = scmp.eq.s32.totalorder %s26, 0
      %p262 = por %p260, %p261
      %p263 = scmp.ne.s32.totalorder %s249, %s250
      %p264 = scmp.eq.s32.totalorder %s27, 1
      %p265 = por %p263, %p264
      %p267 = scmp.ne.s32.totalorder %s250, %s266
      %p268 = scmp.eq.s32.totalorder %s27, 0
      %p269 = por %p267, %p268
      %p270 = scmp.le.s32.totalorder 1, %s21
      %p271 = scmp.lt.s32.totalorder %s21, 3
      %p272 = pnand %p270, %p271
      %p273 = pneg %p272
      // Predicated region
      $region9: #{tpu_custom_call.1} parent=5 // pred_check
        _
      $region10: #{tpu_custom_call.1} parent=5 // pred_check_branch
        %275 = sbr.rel (%p272) target = $region12
      $region11: #{tpu_custom_call.1} parent=5 // pred_region
        %s276 = ssub.s32 %s21, 1
        // Predicated region
        $region13: #{tpu_custom_call.1} parent=11 // pred_check
          %p277 = pneg %p68
        $region14: #{tpu_custom_call.1} parent=11 // pred_check_branch
          %279 = sbr.rel (%p277) target = $region16
        $region15: #{tpu_custom_call.1} parent=11 // pred_region
          %s281 = ssub.s32 1024, 1024
          %282 = vsyncadd [#allocation5], %s281
          %s283 = sshll.u32 [#allocation4], 4
          %s284 = int_to_ptr.vmem [resolvable:$true] %s283
          %289 = dma.hbm_to_vmem [thread:$0]  %s1, 1024, %s284, [#allocation5], 64, 64, 4
        $region16: #{tpu_custom_call.1} parent=11 // pred_fallthru
          _
        // Predicated region
        $region17: #{tpu_custom_call.1} parent=11 // pred_check
          %p290 = pneg %p89
        $region18: #{tpu_custom_call.1} parent=11 // pred_check_branch
          %292 = sbr.rel (%p290) target = $region20
        $region19: #{tpu_custom_call.1} parent=11 // pred_region
          _
        $region20: #{tpu_custom_call.1} parent=11 // pred_fallthru
          _
        // Predicated region
        $region21: #{tpu_custom_call.1} parent=11 // pred_check
          %p293 = pneg %p110
        $region22: #{tpu_custom_call.1} parent=11 // pred_check_branch
          %295 = sbr.rel (%p293) target = $region24
        $region23: #{tpu_custom_call.1} parent=11 // pred_region
          _
        $region24: #{tpu_custom_call.1} parent=11 // pred_fallthru
          _
        // Predicated region
        $region25: #{tpu_custom_call.1} parent=11 // pred_check
          %p296 = pneg %p131
        $region26: #{tpu_custom_call.1} parent=11 // pred_check_branch
          %298 = sbr.rel (%p296) target = $region28
        $region27: #{tpu_custom_call.1} parent=11 // pred_region
          %s300 = ssub.s32 9216, 9216
          %301 = vsyncadd [#allocation5], %s300
          %s302 = sshll.u32 [#allocation6], 4
          %s303 = int_to_ptr.vmem [resolvable:$true] %s302
          %308 = dma.hbm_to_vmem [thread:$0]  %s4, 9216, %s303, [#allocation5], 64, 64, 4
        $region28: #{tpu_custom_call.1} parent=11 // pred_fallthru
          _
        // Predicated region
        $region29: #{tpu_custom_call.1} parent=11 // pred_check
          %p309 = pneg %p152
        $region30: #{tpu_custom_call.1} parent=11 // pred_check_branch
          %311 = sbr.rel (%p309) target = $region32
        $region31: #{tpu_custom_call.1} parent=11 // pred_region
          _
        $region32: #{tpu_custom_call.1} parent=11 // pred_fallthru
          _
        // Predicated region
        $region33: #{tpu_custom_call.1} parent=11 // pred_check
          %p312 = pneg %p173
        $region34: #{tpu_custom_call.1} parent=11 // pred_check_branch
          %314 = sbr.rel (%p312) target = $region36
        $region35: #{tpu_custom_call.1} parent=11 // pred_region
          _
        $region36: #{tpu_custom_call.1} parent=11 // pred_fallthru
          _
        // Predicated region
        $region37: #{tpu_custom_call.1} parent=11 // pred_check
          %p315 = pneg %p194
        $region38: #{tpu_custom_call.1} parent=11 // pred_check_branch
          %317 = sbr.rel (%p315) target = $region40
        $region39: #{tpu_custom_call.1} parent=11 // pred_region
          %s319 = ssub.s32 1024, 1024
          %320 = vsyncadd [#allocation8], %s319
          %s321 = sshll.u32 [#allocation7], 4
          %s322 = int_to_ptr.vmem [resolvable:$true] %s321
          %327 = dma.hbm_to_vmem [thread:$0]  %s7, 1024, %s322, [#allocation8], 64, 64, 4
        $region40: #{tpu_custom_call.1} parent=11 // pred_fallthru
          _
        // Predicated region
        $region41: #{tpu_custom_call.1} parent=11 // pred_check
          %p328 = pneg %p215
        $region42: #{tpu_custom_call.1} parent=11 // pred_check_branch
          %330 = sbr.rel (%p328) target = $region44
        $region43: #{tpu_custom_call.1} parent=11 // pred_region
          _
        $region44: #{tpu_custom_call.1} parent=11 // pred_fallthru
          _
        // Predicated region
        $region45: #{tpu_custom_call.1} parent=11 // pred_check
          %p331 = pneg %p236
        $region46: #{tpu_custom_call.1} parent=11 // pred_check_branch
          %333 = sbr.rel (%p331) target = $region48
        $region47: #{tpu_custom_call.1} parent=11 // pred_region
          _
        $region48: #{tpu_custom_call.1} parent=11 // pred_fallthru
          _
      $region12: #{tpu_custom_call.1} parent=5 // pred_fallthru
        _
      %p334 = scmp.lt.s32.totalorder %s21, 2
      // Predicated region
      $region49: #{tpu_custom_call.1} parent=5 // pred_check
        %p335 = pneg %p334
      $region50: #{tpu_custom_call.1} parent=5 // pred_check_branch
        %337 = sbr.rel (%p335) target = $region52
      $region51: #{tpu_custom_call.1} parent=5 // pred_region
        // Predicated region
        $region53: #{tpu_custom_call.1} parent=51 // pred_check
          %p338 = pneg %p41
        $region54: #{tpu_custom_call.1} parent=51 // pred_check_branch
          %340 = sbr.rel (%p338) target = $region56
        $region55: #{tpu_custom_call.1} parent=51 // pred_region
          %s341 = sand.u32 %s31, 1
          %s342 = scalar_lea.sflag [#allocation3], %s341
          %s343 = sand.u32 %s31, 1
          %s344 = smul.addr %s343, 128
          %s345 = scalar_lea.vmem [#allocation2], %s344
          %s347 = ssub.s32 2048, 2048
          %348 = vsyncadd %s342, %s347
          %s349 = smul.addr %s21, 32
          %s350 = smul.addr %s349, 64
          %s351 = scalar_lea.hbm %s0, %s350
          %s352 = sshll.u32 %s345, 4
          %s353 = int_to_ptr.vmem [resolvable:$true] %s352
          %358 = dma.hbm_to_vmem [thread:$0]  %s351, 2048, %s353, %s342, 64, 64, 4
        $region56: #{tpu_custom_call.1} parent=51 // pred_fallthru
          _
      $region52: #{tpu_custom_call.1} parent=5 // pred_fallthru
        _
      %p359 = scmp.le.s32.totalorder 1, %s21
      %p360 = scmp.lt.s32.totalorder %s21, 3
      %p361 = pnand %p359, %p360
      %p362 = pneg %p361
      // Predicated region
      $region57: #{tpu_custom_call.1} parent=5 // pred_check
        _
      $region58: #{tpu_custom_call.1} parent=5 // pred_check_branch
        %364 = sbr.rel (%p361) target = $region60
      $region59: #{tpu_custom_call.1} parent=5 // pred_region
        %s365 = ssub.s32 %s21, 1
        %s366 = sand.u32 %s34, 1
        %s367 = scalar_lea.sflag [#allocation3], %s366
        %s368 = sand.u32 %s34, 1
        %s369 = smul.addr %s368, 128
        %s370 = scalar_lea.vmem [#allocation2], %s369
        // Predicated region
        $region61: #{tpu_custom_call.1} parent=59 // pred_check
          %p371 = pneg %p47
        $region62: #{tpu_custom_call.1} parent=59 // pred_check_branch
          %373 = sbr.rel (%p371) target = $region64
        $region63: #{tpu_custom_call.1} parent=59 // pred_region
          %374 = dma.done %s367, 2048
        $region64: #{tpu_custom_call.1} parent=59 // pred_fallthru
          _
        // Predicated region
        $region65: #{tpu_custom_call.1} parent=59 // pred_check
          %p375 = pneg %p68
        $region66: #{tpu_custom_call.1} parent=59 // pred_check_branch
          %377 = sbr.rel (%p375) target = $region68
        $region67: #{tpu_custom_call.1} parent=59 // pred_region
          %378 = dma.done [#allocation5], 1024
        $region68: #{tpu_custom_call.1} parent=59 // pred_fallthru
          _
        // Predicated region
        $region69: #{tpu_custom_call.1} parent=59 // pred_check
          %p379 = pneg %p131
        $region70: #{tpu_custom_call.1} parent=59 // pred_check_branch
          %381 = sbr.rel (%p379) target = $region72
        $region71: #{tpu_custom_call.1} parent=59 // pred_region
          %382 = dma.done [#allocation5], 9216
        $region72: #{tpu_custom_call.1} parent=59 // pred_fallthru
          _
        // Predicated region
        $region73: #{tpu_custom_call.1} parent=59 // pred_check
          %p383 = pneg %p194
        $region74: #{tpu_custom_call.1} parent=59 // pred_check_branch
          %385 = sbr.rel (%p383) target = $region76
        $region75: #{tpu_custom_call.1} parent=59 // pred_region
          %386 = dma.done [#allocation8], 1024
        $region76: #{tpu_custom_call.1} parent=59 // pred_fallthru
          _
        %s387 = sand.u32 %s34, 1
        %s388 = scalar_lea.sflag [#allocation3], %s387
        %s389 = sand.u32 %s34, 1
        %s390 = smul.addr %s389, 128
        %s391 = scalar_lea.vmem [#allocation2], %s390
        %p392 = pneg %p47
        %p393 = pneg %p44
        %p394 = pneg %p68
        %p395 = pneg %p65
        %p396 = pneg %p89
        %p397 = pneg %p86
        %p398 = pneg %p110
        %p399 = pneg %p107
        %p400 = pneg %p131
        %p401 = pneg %p128
        %p402 = pneg %p152
        %p403 = pneg %p149
        %p404 = pneg %p173
        %p405 = pneg %p170
        %p406 = pneg %p194
        %p407 = pneg %p191
        %p408 = pneg %p215
        %p409 = pneg %p212
        %p410 = pneg %p236
        %p411 = pneg %p233
        %p412 = pneg %p262
        %p413 = pneg %p259
        %p414 = scmp.lt.s32.totalorder %s26, 1
        %s415 = scalar_select %p414, %s26, 1
        %s416 = smul.addr %s415, 7
        %s417 = smul.addr %s416, 8
        %s418 = scalar_lea.vmem %s10, %s417
        %p419 = scmp.lt.s32.totalorder %s26, 1
        %s420 = scalar_select %p419, %s26, 1
        %s421 = smul.addr %s420, 7
        %s422 = smul.addr %s421, 8
        %s423 = scalar_lea.vmem %s10, %s422
        %v425 = vld [vmem:[%s370] sm:$0xf]
        %v426 = vld [vmem:[%s370 + $0x4] sm:$0xf]
        %v427 = vld [vmem:[%s370 + $0x8] sm:$0xf]
        %v428 = vld [vmem:[%s370 + $0xc] sm:$0xf]
        %v429 = vld [vmem:[%s370 + $0x10] sm:$0xf]
        %v430 = vld [vmem:[%s370 + $0x14] sm:$0xf]
        %v431 = vld [vmem:[%s370 + $0x18] sm:$0xf]
        %v432 = vld [vmem:[%s370 + $0x1c] sm:$0xf]
        %v433 = vld [vmem:[%s370 + $0x20] sm:$0xf]
        %v434 = vld [vmem:[%s370 + $0x24] sm:$0xf]
        %v435 = vld [vmem:[%s370 + $0x28] sm:$0xf]
        %v436 = vld [vmem:[%s370 + $0x2c] sm:$0xf]
        %v437 = vld [vmem:[%s370 + $0x30] sm:$0xf]
        %v438 = vld [vmem:[%s370 + $0x34] sm:$0xf]
        %v439 = vld [vmem:[%s370 + $0x38] sm:$0xf]
        %v440 = vld [vmem:[%s370 + $0x3c] sm:$0xf]
        %v441 = vld [vmem:[%s370 + $0x40] sm:$0xf]
        %v442 = vld [vmem:[%s370 + $0x44] sm:$0xf]
        %v443 = vld [vmem:[%s370 + $0x48] sm:$0xf]
        %v444 = vld [vmem:[%s370 + $0x4c] sm:$0xf]
        %v445 = vld [vmem:[%s370 + $0x50] sm:$0xf]
        %v446 = vld [vmem:[%s370 + $0x54] sm:$0xf]
        %v447 = vld [vmem:[%s370 + $0x58] sm:$0xf]
        %v448 = vld [vmem:[%s370 + $0x5c] sm:$0xf]
        %v449 = vld [vmem:[%s370 + $0x60] sm:$0xf]
        %v450 = vld [vmem:[%s370 + $0x64] sm:$0xf]
        %v451 = vld [vmem:[%s370 + $0x68] sm:$0xf]
        %v452 = vld [vmem:[%s370 + $0x6c] sm:$0xf]
        %v453 = vld [vmem:[%s370 + $0x70] sm:$0xf]
        %v454 = vld [vmem:[%s370 + $0x74] sm:$0xf]
        %v455 = vld [vmem:[%s370 + $0x78] sm:$0xf]
        %v456 = vld [vmem:[%s370 + $0x7c] sm:$0xf]
        %v457 = vld [vmem:[#allocation4] sm:$0xf]
        %v458 = vld [vmem:[#allocation4 + $0x4] sm:$0xf]
        %v459 = vld [vmem:[#allocation4 + $0x8] sm:$0xf]
        %v460 = vld [vmem:[#allocation4 + $0xc] sm:$0xf]
        %v461 = vld [vmem:[#allocation4 + $0x10] sm:$0xf]
        %v462 = vld [vmem:[#allocation4 + $0x14] sm:$0xf]
        %v463 = vld [vmem:[#allocation4 + $0x18] sm:$0xf]
        %v464 = vld [vmem:[#allocation4 + $0x1c] sm:$0xf]
        %v465 = vld [vmem:[#allocation4 + $0x20] sm:$0xf]
        %v466 = vld [vmem:[#allocation4 + $0x24] sm:$0xf]
        %v467 = vld [vmem:[#allocation4 + $0x28] sm:$0xf]
        %v468 = vld [vmem:[#allocation4 + $0x2c] sm:$0xf]
        %v469 = vld [vmem:[#allocation4 + $0x30] sm:$0xf]
        %v470 = vld [vmem:[#allocation4 + $0x34] sm:$0xf]
        %v471 = vld [vmem:[#allocation4 + $0x38] sm:$0xf]
        %v472 = vld [vmem:[#allocation4 + $0x3c] sm:$0xf]
        %v505 = vunpack.c.l.b16 %v425
        %v506 = vunpack.c.l.b16 %v426
        %v507 = vunpack.c.l.b16 %v427
        %v508 = vunpack.c.l.b16 %v428
        %v509 = vunpack.c.l.b16 %v429
        %v510 = vunpack.c.l.b16 %v430
        %v511 = vunpack.c.l.b16 %v431
        %v512 = vunpack.c.l.b16 %v432
        %v513 = vunpack.c.l.b16 %v433
        %v514 = vunpack.c.l.b16 %v434
        %v515 = vunpack.c.l.b16 %v435
        %v516 = vunpack.c.l.b16 %v436
        %v517 = vunpack.c.l.b16 %v437
        %v518 = vunpack.c.l.b16 %v438
        %v519 = vunpack.c.l.b16 %v439
        %v520 = vunpack.c.l.b16 %v440
        %v521 = vunpack.c.l.b16 %v441
        %v522 = vunpack.c.l.b16 %v442
        %v523 = vunpack.c.l.b16 %v443
        %v524 = vunpack.c.l.b16 %v444
        %v525 = vunpack.c.l.b16 %v445
        %v526 = vunpack.c.l.b16 %v446
        %v527 = vunpack.c.l.b16 %v447
        %v528 = vunpack.c.l.b16 %v448
        %v529 = vunpack.c.l.b16 %v449
        %v530 = vunpack.c.l.b16 %v450
        %v531 = vunpack.c.l.b16 %v451
        %v532 = vunpack.c.l.b16 %v452
        %v533 = vunpack.c.l.b16 %v453
        %v534 = vunpack.c.l.b16 %v454
        %v535 = vunpack.c.l.b16 %v455
        %v536 = vunpack.c.l.b16 %v456
        %v537 = vpack.c.b16 %v506, %v505
        %v538 = vpack.c.b16 %v508, %v507
        %v539 = vpack.c.b16 %v510, %v509
        %v540 = vpack.c.b16 %v512, %v511
        %v541 = vpack.c.b16 %v514, %v513
        %v542 = vpack.c.b16 %v516, %v515
        %v543 = vpack.c.b16 %v518, %v517
        %v544 = vpack.c.b16 %v520, %v519
        %v545 = vpack.c.b16 %v522, %v521
        %v546 = vpack.c.b16 %v524, %v523
        %v547 = vpack.c.b16 %v526, %v525
        %v548 = vpack.c.b16 %v528, %v527
        %v549 = vpack.c.b16 %v530, %v529
        %v550 = vpack.c.b16 %v532, %v531
        %v551 = vpack.c.b16 %v534, %v533
        %v552 = vpack.c.b16 %v536, %v535
        %v585 = vunpack.c.l.b16 %v457
        %v586 = vunpack.c.l.b16 %v458
        %v587 = vunpack.c.l.b16 %v459
        %v588 = vunpack.c.l.b16 %v460
        %v589 = vunpack.c.l.b16 %v461
        %v590 = vunpack.c.l.b16 %v462
        %v591 = vunpack.c.l.b16 %v463
        %v592 = vunpack.c.l.b16 %v464
        %v593 = vunpack.c.l.b16 %v465
        %v594 = vunpack.c.l.b16 %v466
        %v595 = vunpack.c.l.b16 %v467
        %v596 = vunpack.c.l.b16 %v468
        %v597 = vunpack.c.l.b16 %v469
        %v598 = vunpack.c.l.b16 %v470
        %v599 = vunpack.c.l.b16 %v471
        %v600 = vunpack.c.l.b16 %v472
        %v601 = vpack.c.b16 %v586, %v585
        %v602 = vpack.c.b16 %v588, %v587
        %v603 = vpack.c.b16 %v590, %v589
        %v604 = vpack.c.b16 %v592, %v591
        %v605 = vpack.c.b16 %v594, %v593
        %v606 = vpack.c.b16 %v596, %v595
        %v607 = vpack.c.b16 %v598, %v597
        %v608 = vpack.c.b16 %v600, %v599
        %617 = vmatprep.subr.bf16.mxu0 0
        %618 = vmatpush1.bf16.msra.mxu0 %v601
        %619 = vmatprep.subr.bf16.mxu0 0
        %620 = vmatpush1.bf16.msra.mxu0 %v602
        %621 = vmatprep.subr.bf16.mxu0 0
        %622 = vmatpush1.bf16.msra.mxu0 %v603
        %623 = vmatprep.subr.bf16.mxu0 0
        %624 = vmatpush1.bf16.msra.mxu0 %v604
        %625 = vmatprep.subr.bf16.mxu0 0
        %626 = vmatpush1.bf16.msra.mxu0 %v605
        %627 = vmatprep.subr.bf16.mxu0 0
        %628 = vmatpush1.bf16.msra.mxu0 %v606
        %629 = vmatprep.subr.bf16.mxu0 0
        %630 = vmatpush1.bf16.msra.mxu0 %v607
        %631 = vmatprep.subr.bf16.mxu0 0
        %632 = vmatpush1.bf16.msra.mxu0 %v608
        %633 = vmatprep.subr.bf16.mxu0 0
        %634 = vmatpush1.bf16.msra.mxu0 0
        %635 = vmatprep.subr.bf16.mxu0 0
        %636 = vmatpush1.bf16.msra.mxu0 0
        %637 = vmatprep.subr.bf16.mxu0 0
        %638 = vmatpush1.bf16.msra.mxu0 0
        %639 = vmatprep.subr.bf16.mxu0 0
        %640 = vmatpush1.bf16.msra.mxu0 0
        %641 = vmatprep.subr.bf16.mxu0 0
        %642 = vmatpush1.bf16.msra.mxu0 0
        %643 = vmatprep.subr.bf16.mxu0 0
        %644 = vmatpush1.bf16.msra.mxu0 0
        %645 = vmatprep.subr.bf16.mxu0 0
        %646 = vmatpush1.bf16.msra.mxu0 0
        %647 = vmatprep.subr.bf16.mxu0 0
        %648 = vmatpush1.bf16.msra.mxu0 0
        %649 = vmatprep.mubr.bf16.mxu0 0
        %650 = vmatmul.mubr.bf16.gmra.mrb[0].mxu0 %v537
        %v651 = vpop.f32.mrb[0].mxu0
        %v652 = vadd.f32 0.0, %v651
        %v653 = vpop.f32.mrb[0].mxu0
        %v654 = vpop.f32.mrb[0].mxu0
        %v655 = vadd.f32 0.0, %v654
        %v656 = vpop.f32.mrb[0].mxu0
        %657 = vmatprep.mubr.bf16.mxu0 0
        %658 = vmatmul.mubr.bf16.gmra.mrb[0].mxu0 %v538
        %v659 = vpop.f32.mrb[0].mxu0
        %v660 = vadd.f32 0.0, %v659
        %v661 = vpop.f32.mrb[0].mxu0
        %v662 = vpop.f32.mrb[0].mxu0
        %v663 = vadd.f32 0.0, %v662
        %v664 = vpop.f32.mrb[0].mxu0
        %665 = vmatprep.mubr.bf16.mxu0 0
        %666 = vmatmul.mubr.bf16.gmra.mrb[0].mxu0 %v539
        %v667 = vpop.f32.mrb[0].mxu0
        %v668 = vadd.f32 0.0, %v667
        %v669 = vpop.f32.mrb[0].mxu0
        %v670 = vpop.f32.mrb[0].mxu0
        %v671 = vadd.f32 0.0, %v670
        %v672 = vpop.f32.mrb[0].mxu0
        %673 = vmatprep.mubr.bf16.mxu0 0
        %674 = vmatmul.mubr.bf16.gmra.mrb[0].mxu0 %v540
        %v675 = vpop.f32.mrb[0].mxu0
        %v676 = vadd.f32 0.0, %v675
        %v677 = vpop.f32.mrb[0].mxu0
        %v678 = vpop.f32.mrb[0].mxu0
        %v679 = vadd.f32 0.0, %v678
        %v680 = vpop.f32.mrb[0].mxu0
        %681 = vmatprep.mubr.bf16.mxu0 0
        %682 = vmatmul.mubr.bf16.gmra.mrb[0].mxu0 %v541
        %v683 = vpop.f32.mrb[0].mxu0
        %v684 = vadd.f32 0.0, %v683
        %v685 = vpop.f32.mrb[0].mxu0
        %v686 = vpop.f32.mrb[0].mxu0
        %v687 = vadd.f32 0.0, %v686
        %v688 = vpop.f32.mrb[0].mxu0
        %689 = vmatprep.mubr.bf16.mxu0 0
        %690 = vmatmul.mubr.bf16.gmra.mrb[0].mxu0 %v542
        %v691 = vpop.f32.mrb[0].mxu0
        %v692 = vadd.f32 0.0, %v691
        %v693 = vpop.f32.mrb[0].mxu0
        %v694 = vpop.f32.mrb[0].mxu0
        %v695 = vadd.f32 0.0, %v694
        %v696 = vpop.f32.mrb[0].mxu0
        %697 = vmatprep.mubr.bf16.mxu0 0
        %698 = vmatmul.mubr.bf16.gmra.mrb[0].mxu0 %v543
        %v699 = vpop.f32.mrb[0].mxu0
        %v700 = vadd.f32 0.0, %v699
        %v701 = vpop.f32.mrb[0].mxu0
        %v702 = vpop.f32.mrb[0].mxu0
        %v703 = vadd.f32 0.0, %v702
        %v704 = vpop.f32.mrb[0].mxu0
        %705 = vmatprep.mubr.bf16.mxu0 0
        %706 = vmatmul.mubr.bf16.gmra.mrb[0].mxu0 %v544
        %v707 = vpop.f32.mrb[0].mxu0
        %v708 = vadd.f32 0.0, %v707
        %v709 = vpop.f32.mrb[0].mxu0
        %v710 = vpop.f32.mrb[0].mxu0
        %v711 = vadd.f32 0.0, %v710
        %v712 = vpop.f32.mrb[0].mxu0
        %713 = vmatprep.mubr.bf16.mxu0 0
        %714 = vmatmul.mubr.bf16.gmra.mrb[0].mxu0 %v545
        %v715 = vpop.f32.mrb[0].mxu0
        %v716 = vadd.f32 0.0, %v715
        %v717 = vpop.f32.mrb[0].mxu0
        %v718 = vpop.f32.mrb[0].mxu0
        %v719 = vadd.f32 0.0, %v718
        %v720 = vpop.f32.mrb[0].mxu0
        %721 = vmatprep.mubr.bf16.mxu0 0
        %722 = vmatmul.mubr.bf16.gmra.mrb[0].mxu0 %v546
        %v723 = vpop.f32.mrb[0].mxu0
        %v724 = vadd.f32 0.0, %v723
        %v725 = vpop.f32.mrb[0].mxu0
        %v726 = vpop.f32.mrb[0].mxu0
        %v727 = vadd.f32 0.0, %v726
        %v728 = vpop.f32.mrb[0].mxu0
        %729 = vmatprep.mubr.bf16.mxu0 0
        %730 = vmatmul.mubr.bf16.gmra.mrb[0].mxu0 %v547
        %v731 = vpop.f32.mrb[0].mxu0
        %v732 = vadd.f32 0.0, %v731
        %v733 = vpop.f32.mrb[0].mxu0
        %v734 = vpop.f32.mrb[0].mxu0
        %v735 = vadd.f32 0.0, %v734
        %v736 = vpop.f32.mrb[0].mxu0
        %737 = vmatprep.mubr.bf16.mxu0 0
        %738 = vmatmul.mubr.bf16.gmra.mrb[0].mxu0 %v548
        %v739 = vpop.f32.mrb[0].mxu0
        %v740 = vadd.f32 0.0, %v739
        %v741 = vpop.f32.mrb[0].mxu0
        %v742 = vpop.f32.mrb[0].mxu0
        %v743 = vadd.f32 0.0, %v742
        %v744 = vpop.f32.mrb[0].mxu0
        %745 = vmatprep.mubr.bf16.mxu0 0
        %746 = vmatmul.mubr.bf16.gmra.mrb[0].mxu0 %v549
        %v747 = vpop.f32.mrb[0].mxu0
        %v748 = vadd.f32 0.0, %v747
        %v749 = vpop.f32.mrb[0].mxu0
        %v750 = vpop.f32.mrb[0].mxu0
        %v751 = vadd.f32 0.0, %v750
        %v752 = vpop.f32.mrb[0].mxu0
        %753 = vmatprep.mubr.bf16.mxu0 0
        %754 = vmatmul.mubr.bf16.gmra.mrb[0].mxu0 %v550
        %v755 = vpop.f32.mrb[0].mxu0
        %v756 = vadd.f32 0.0, %v755
        %v757 = vpop.f32.mrb[0].mxu0
        %v758 = vpop.f32.mrb[0].mxu0
        %v759 = vadd.f32 0.0, %v758
        %v760 = vpop.f32.mrb[0].mxu0
        %761 = vmatprep.mubr.bf16.mxu0 0
        %762 = vmatmul.mubr.bf16.gmra.mrb[0].mxu0 %v551
        %v763 = vpop.f32.mrb[0].mxu0
        %v764 = vadd.f32 0.0, %v763
        %v765 = vpop.f32.mrb[0].mxu0
        %v766 = vpop.f32.mrb[0].mxu0
        %v767 = vadd.f32 0.0, %v766
        %v768 = vpop.f32.mrb[0].mxu0
        %769 = vmatprep.mubr.bf16.mxu0 0
        %770 = vmatmul.mubr.bf16.gmra.mrb[0].mxu0 %v552
        %v771 = vpop.f32.mrb[0].mxu0
        %v772 = vadd.f32 0.0, %v771
        %v773 = vpop.f32.mrb[0].mxu0
        %v774 = vpop.f32.mrb[0].mxu0
        %v775 = vadd.f32 0.0, %v774
        %v776 = vpop.f32.mrb[0].mxu0
        %777 = vdwg.mxu0
        %v778 = vld [vmem:[%s2] sm:$0x1]
        %v780 = vlaneseq
        %v781 = vshrl.u32 %v780, 7
        %v782 = vsub.s32 0, %v781
        %v783 = vrot.slane %v778, %v782
        %v785 = vmul.f32 %v652, %v783
        %v786 = vmul.f32 %v655, %v783
        %v787 = vmul.f32 %v660, %v783
        %v788 = vmul.f32 %v663, %v783
        %v789 = vmul.f32 %v668, %v783
        %v790 = vmul.f32 %v671, %v783
        %v791 = vmul.f32 %v676, %v783
        %v792 = vmul.f32 %v679, %v783
        %v793 = vmul.f32 %v684, %v783
        %v794 = vmul.f32 %v687, %v783
        %v795 = vmul.f32 %v692, %v783
        %v796 = vmul.f32 %v695, %v783
        %v797 = vmul.f32 %v700, %v783
        %v798 = vmul.f32 %v703, %v783
        %v799 = vmul.f32 %v708, %v783
        %v800 = vmul.f32 %v711, %v783
        %v801 = vmul.f32 %v716, %v783
        %v802 = vmul.f32 %v719, %v783
        %v803 = vmul.f32 %v724, %v783
        %v804 = vmul.f32 %v727, %v783
        %v805 = vmul.f32 %v732, %v783
        %v806 = vmul.f32 %v735, %v783
        %v807 = vmul.f32 %v740, %v783
        %v808 = vmul.f32 %v743, %v783
        %v809 = vmul.f32 %v748, %v783
        %v810 = vmul.f32 %v751, %v783
        %v811 = vmul.f32 %v756, %v783
        %v812 = vmul.f32 %v759, %v783
        %v813 = vmul.f32 %v764, %v783
        %v814 = vmul.f32 %v767, %v783
        %v815 = vmul.f32 %v772, %v783
        %v816 = vmul.f32 %v775, %v783
        %v817 = vld [vmem:[%s3] sm:$0x1]
        %v819 = vlaneseq
        %v820 = vshrl.u32 %v819, 7
        %v821 = vsub.s32 0, %v820
        %v822 = vrot.slane %v817, %v821
        %v824 = vadd.f32 %v785, %v822
        %v825 = vadd.f32 %v786, %v822
        %v826 = vadd.f32 %v787, %v822
        %v827 = vadd.f32 %v788, %v822
        %v828 = vadd.f32 %v789, %v822
        %v829 = vadd.f32 %v790, %v822
        %v830 = vadd.f32 %v791, %v822
        %v831 = vadd.f32 %v792, %v822
        %v832 = vadd.f32 %v793, %v822
        %v833 = vadd.f32 %v794, %v822
        %v834 = vadd.f32 %v795, %v822
        %v835 = vadd.f32 %v796, %v822
        %v836 = vadd.f32 %v797, %v822
        %v837 = vadd.f32 %v798, %v822
        %v838 = vadd.f32 %v799, %v822
        %v839 = vadd.f32 %v800, %v822
        %v840 = vadd.f32 %v801, %v822
        %v841 = vadd.f32 %v802, %v822
        %v842 = vadd.f32 %v803, %v822
        %v843 = vadd.f32 %v804, %v822
        %v844 = vadd.f32 %v805, %v822
        %v845 = vadd.f32 %v806, %v822
        %v846 = vadd.f32 %v807, %v822
        %v847 = vadd.f32 %v808, %v822
        %v848 = vadd.f32 %v809, %v822
        %v849 = vadd.f32 %v810, %v822
        %v850 = vadd.f32 %v811, %v822
        %v851 = vadd.f32 %v812, %v822
        %v852 = vadd.f32 %v813, %v822
        %v853 = vadd.f32 %v814, %v822
        %v854 = vadd.f32 %v815, %v822
        %v855 = vadd.f32 %v816, %v822
        %v856 = vmax.f32 %v824, 0.0
        %v857 = vmax.f32 %v825, 0.0
        %v858 = vmax.f32 %v826, 0.0
        %v859 = vmax.f32 %v827, 0.0
        %v860 = vmax.f32 %v828, 0.0
        %v861 = vmax.f32 %v829, 0.0
        %v862 = vmax.f32 %v830, 0.0
        %v863 = vmax.f32 %v831, 0.0
        %v864 = vmax.f32 %v832, 0.0
        %v865 = vmax.f32 %v833, 0.0
        %v866 = vmax.f32 %v834, 0.0
        %v867 = vmax.f32 %v835, 0.0
        %v868 = vmax.f32 %v836, 0.0
        %v869 = vmax.f32 %v837, 0.0
        %v870 = vmax.f32 %v838, 0.0
        %v871 = vmax.f32 %v839, 0.0
        %v872 = vmax.f32 %v840, 0.0
        %v873 = vmax.f32 %v841, 0.0
        %v874 = vmax.f32 %v842, 0.0
        %v875 = vmax.f32 %v843, 0.0
        %v876 = vmax.f32 %v844, 0.0
        %v877 = vmax.f32 %v845, 0.0
        %v878 = vmax.f32 %v846, 0.0
        %v879 = vmax.f32 %v847, 0.0
        %v880 = vmax.f32 %v848, 0.0
        %v881 = vmax.f32 %v849, 0.0
        %v882 = vmax.f32 %v850, 0.0
        %v883 = vmax.f32 %v851, 0.0
        %v884 = vmax.f32 %v852, 0.0
        %v885 = vmax.f32 %v853, 0.0
        %v886 = vmax.f32 %v854, 0.0
        %v887 = vmax.f32 %v855, 0.0
        %v888 = vpack.c.bf16 %v857, %v856
        %v889 = vpack.c.bf16 %v859, %v858
        %v890 = vpack.c.bf16 %v861, %v860
        %v891 = vpack.c.bf16 %v863, %v862
        %v892 = vpack.c.bf16 %v865, %v864
        %v893 = vpack.c.bf16 %v867, %v866
        %v894 = vpack.c.bf16 %v869, %v868
        %v895 = vpack.c.bf16 %v871, %v870
        %v896 = vpack.c.bf16 %v873, %v872
        %v897 = vpack.c.bf16 %v875, %v874
        %v898 = vpack.c.bf16 %v877, %v876
        %v899 = vpack.c.bf16 %v879, %v878
        %v900 = vpack.c.bf16 %v881, %v880
        %v901 = vpack.c.bf16 %v883, %v882
        %v902 = vpack.c.bf16 %v885, %v884
        %v903 = vpack.c.bf16 %v887, %v886
        %v920 = vunpack.c.l.b16 %v888
        %v921 = vunpack.c.h.b16 %v888
        %v922 = vunpack.c.l.b16 %v889
        %v923 = vunpack.c.h.b16 %v889
        %v924 = vunpack.c.l.b16 %v890
        %v925 = vunpack.c.h.b16 %v890
        %v926 = vunpack.c.l.b16 %v891
        %v927 = vunpack.c.h.b16 %v891
        %v928 = vunpack.c.l.b16 %v892
        %v929 = vunpack.c.h.b16 %v892
        %v930 = vunpack.c.l.b16 %v893
        %v931 = vunpack.c.h.b16 %v893
        %v932 = vunpack.c.l.b16 %v894
        %v933 = vunpack.c.h.b16 %v894
        %v934 = vunpack.c.l.b16 %v895
        %v935 = vunpack.c.h.b16 %v895
        %v936 = vunpack.c.l.b16 %v896
        %v937 = vunpack.c.h.b16 %v896
        %v938 = vunpack.c.l.b16 %v897
        %v939 = vunpack.c.h.b16 %v897
        %v940 = vunpack.c.l.b16 %v898
        %v941 = vunpack.c.h.b16 %v898
        %v942 = vunpack.c.l.b16 %v899
        %v943 = vunpack.c.l.b16 %v900
        %v944 = vunpack.c.h.b16 %v900
        %v945 = vunpack.c.l.b16 %v901
        %v946 = vunpack.c.h.b16 %v901
        %v947 = vunpack.c.l.b16 %v902
        %v948 = vunpack.c.h.b16 %v902
        %v949 = vunpack.c.l.b16 %v903
        %v950 = vpack.c.b16 %v920, %v920
        %v951 = vpack.c.b16 %v921, %v921
        %v952 = vpack.c.b16 %v922, %v922
        %v953 = vpack.c.b16 %v923, %v923
        %v954 = vpack.c.b16 %v924, %v924
        %v955 = vpack.c.b16 %v925, %v925
        %v956 = vpack.c.b16 %v926, %v926
        %v957 = vpack.c.b16 %v927, %v927
        %v958 = vpack.c.b16 %v936, %v936
        %v959 = vpack.c.b16 %v937, %v937
        %v960 = vpack.c.b16 %v938, %v938
        %v961 = vpack.c.b16 %v939, %v939
        %v962 = vpack.c.b16 %v940, %v940
        %v963 = vpack.c.b16 %v941, %v941
        %v964 = vpack.c.b16 %v942, %v942
        %v966 = vshrl.u32 %v950, 16
        %v968 = vshll.u32 %v950, 16
        %v970 = vrot.slane %v968, 1
        %v971 = vor.u32 %v966, %v970
        %v973 = vshrl.u32 %v951, 16
        %v975 = vshll.u32 %v951, 16
        %v977 = vrot.slane %v975, 1
        %v978 = vor.u32 %v973, %v977
        %v980 = vshrl.u32 %v952, 16
        %v982 = vshll.u32 %v952, 16
        %v984 = vrot.slane %v982, 1
        %v985 = vor.u32 %v980, %v984
        %v987 = vshrl.u32 %v953, 16
        %v989 = vshll.u32 %v953, 16
        %v991 = vrot.slane %v989, 1
        %v992 = vor.u32 %v987, %v991
        %v994 = vshrl.u32 %v954, 16
        %v996 = vshll.u32 %v954, 16
        %v998 = vrot.slane %v996, 1
        %v999 = vor.u32 %v994, %v998
        %v1001 = vshrl.u32 %v955, 16
        %v1003 = vshll.u32 %v955, 16
        %v1005 = vrot.slane %v1003, 1
        %v1006 = vor.u32 %v1001, %v1005
        %v1008 = vshrl.u32 %v956, 16
        %v1010 = vshll.u32 %v956, 16
        %v1012 = vrot.slane %v1010, 1
        %v1013 = vor.u32 %v1008, %v1012
        %v1015 = vshrl.u32 %v957, 16
        %v1017 = vshll.u32 %v957, 16
        %v1019 = vrot.slane %v1017, 1
        %v1020 = vor.u32 %v1015, %v1019
        %v1022 = vshrl.u32 %v958, 16
        %v1024 = vshll.u32 %v958, 16
        %v1026 = vrot.slane %v1024, 1
        %v1027 = vor.u32 %v1022, %v1026
        %v1029 = vshrl.u32 %v959, 16
        %v1031 = vshll.u32 %v959, 16
        %v1033 = vrot.slane %v1031, 1
        %v1034 = vor.u32 %v1029, %v1033
        %v1036 = vshrl.u32 %v960, 16
        %v1038 = vshll.u32 %v960, 16
        %v1040 = vrot.slane %v1038, 1
        %v1041 = vor.u32 %v1036, %v1040
        %v1043 = vshrl.u32 %v961, 16
        %v1045 = vshll.u32 %v961, 16
        %v1047 = vrot.slane %v1045, 1
        %v1048 = vor.u32 %v1043, %v1047
        %v1050 = vshrl.u32 %v962, 16
        %v1052 = vshll.u32 %v962, 16
        %v1054 = vrot.slane %v1052, 1
        %v1055 = vor.u32 %v1050, %v1054
        %v1057 = vshrl.u32 %v963, 16
        %v1059 = vshll.u32 %v963, 16
        %v1061 = vrot.slane %v1059, 1
        %v1062 = vor.u32 %v1057, %v1061
        %v1064 = vshrl.u32 %v964, 16
        %v1066 = vshll.u32 %v964, 16
        %v1068 = vrot.slane %v1066, 1
        %v1069 = vor.u32 %v1064, %v1068
        %vm1085 = vcmask 1043456
        %vm1086 = vsmask.f32 3328
        %vm1087 = vmand %vm1085, %vm1086
        %v1088 = vsel %vm1087, %v971, 0
        %v1089 = vsel %vm1087, %v978, 0
        %v1090 = vsel %vm1087, %v985, 0
        %v1091 = vsel %vm1087, %v992, 0
        %v1092 = vsel %vm1087, %v999, 0
        %v1093 = vsel %vm1087, %v1006, 0
        %v1094 = vsel %vm1087, %v1013, 0
        %v1095 = vsel %vm1087, %v1020, 0
        %v1096 = vsel %vm1087, %v1027, 0
        %v1097 = vsel %vm1087, %v1034, 0
        %v1098 = vsel %vm1087, %v1041, 0
        %v1099 = vsel %vm1087, %v1048, 0
        %v1100 = vsel %vm1087, %v1055, 0
        %v1101 = vsel %vm1087, %v1062, 0
        %v1102 = vsel %vm1087, %v1069, 0
        %v1103 = vld [vmem:[#allocation6] sm:$0xf]
        %v1104 = vld [vmem:[#allocation6 + $0x4] sm:$0xf]
        %v1105 = vld [vmem:[#allocation6 + $0x8] sm:$0xf]
        %v1106 = vld [vmem:[#allocation6 + $0xc] sm:$0xf]
        %v1107 = vld [vmem:[#allocation6 + $0x10] sm:$0xf]
        %v1108 = vld [vmem:[#allocation6 + $0x14] sm:$0xf]
        %v1109 = vld [vmem:[#allocation6 + $0x18] sm:$0xf]
        %v1110 = vld [vmem:[#allocation6 + $0x1c] sm:$0xf]
        %v1111 = vld [vmem:[#allocation6 + $0x20] sm:$0xf]
        %v1112 = vld [vmem:[#allocation6 + $0x24] sm:$0xf]
        %v1113 = vld [vmem:[#allocation6 + $0x28] sm:$0xf]
        %v1114 = vld [vmem:[#allocation6 + $0x2c] sm:$0xf]
        %v1115 = vld [vmem:[#allocation6 + $0x30] sm:$0xf]
        %v1116 = vld [vmem:[#allocation6 + $0x34] sm:$0xf]
        %v1117 = vld [vmem:[#allocation6 + $0x38] sm:$0xf]
        %v1118 = vld [vmem:[#allocation6 + $0x3c] sm:$0xf]
        %s1119 = scalar_lea.vmem [#allocation6], 64
        %v1120 = vld [vmem:[%s1119] sm:$0xf]
        %v1121 = vld [vmem:[%s1119 + $0x4] sm:$0xf]
        %v1122 = vld [vmem:[%s1119 + $0x8] sm:$0xf]
        %v1123 = vld [vmem:[%s1119 + $0xc] sm:$0xf]
        %v1124 = vld [vmem:[%s1119 + $0x10] sm:$0xf]
        %v1125 = vld [vmem:[%s1119 + $0x14] sm:$0xf]
        %v1126 = vld [vmem:[%s1119 + $0x18] sm:$0xf]
        %v1127 = vld [vmem:[%s1119 + $0x1c] sm:$0xf]
        %v1128 = vld [vmem:[%s1119 + $0x20] sm:$0xf]
        %v1129 = vld [vmem:[%s1119 + $0x24] sm:$0xf]
        %v1130 = vld [vmem:[%s1119 + $0x28] sm:$0xf]
        %v1131 = vld [vmem:[%s1119 + $0x2c] sm:$0xf]
        %v1132 = vld [vmem:[%s1119 + $0x30] sm:$0xf]
        %v1133 = vld [vmem:[%s1119 + $0x34] sm:$0xf]
        %v1134 = vld [vmem:[%s1119 + $0x38] sm:$0xf]
        %v1135 = vld [vmem:[%s1119 + $0x3c] sm:$0xf]
        %v1136 = vpack.c.b16 %v929, %v928
        %v1137 = vpack.c.b16 %v931, %v930
        %v1138 = vpack.c.b16 %v933, %v932
        %v1139 = vpack.c.b16 %v934, %v934
        %v1160 = vunpack.c.l.b16 %v1120
        %v1161 = vunpack.c.l.b16 %v1121
        %v1162 = vunpack.c.l.b16 %v1122
        %v1163 = vunpack.c.l.b16 %v1123
        %v1164 = vunpack.c.l.b16 %v1124
        %v1165 = vunpack.c.l.b16 %v1125
        %v1166 = vunpack.c.l.b16 %v1126
        %v1167 = vunpack.c.l.b16 %v1127
        %v1168 = vunpack.c.l.b16 %v1128
        %v1169 = vunpack.c.l.b16 %v1129
        %v1170 = vunpack.c.l.b16 %v1130
        %v1171 = vunpack.c.l.b16 %v1131
        %v1172 = vunpack.c.l.b16 %v1132
        %v1173 = vunpack.c.l.b16 %v1133
        %v1174 = vunpack.c.l.b16 %v1134
        %v1175 = vunpack.c.l.b16 %v1135
        %v1176 = vpack.c.b16 %v1161, %v1160
        %v1177 = vpack.c.b16 %v1163, %v1162
        %v1178 = vpack.c.b16 %v1165, %v1164
        %v1179 = vpack.c.b16 %v1167, %v1166
        %v1180 = vpack.c.b16 %v1169, %v1168
        %v1181 = vpack.c.b16 %v1171, %v1170
        %v1182 = vpack.c.b16 %v1173, %v1172
        %v1183 = vpack.c.b16 %v1175, %v1174
        %1192 = vmatprep.subr.bf16.mxu0 0
        %1193 = vmatpush1.bf16.msra.mxu0 %v1176
        %1194 = vmatprep.subr.bf16.mxu0 0
        %1195 = vmatpush1.bf16.msra.mxu0 %v1177
        %1196 = vmatprep.subr.bf16.mxu0 0
        %1197 = vmatpush1.bf16.msra.mxu0 %v1178
        %1198 = vmatprep.subr.bf16.mxu0 0
        %1199 = vmatpush1.bf16.msra.mxu0 %v1179
        %1200 = vmatprep.subr.bf16.mxu0 0
        %1201 = vmatpush1.bf16.msra.mxu0 %v1180
        %1202 = vmatprep.subr.bf16.mxu0 0
        %1203 = vmatpush1.bf16.msra.mxu0 %v1181
        %1204 = vmatprep.subr.bf16.mxu0 0
        %1205 = vmatpush1.bf16.msra.mxu0 %v1182
        %1206 = vmatprep.subr.bf16.mxu0 0
        %1207 = vmatpush1.bf16.msra.mxu0 %v1183
        %1208 = vmatprep.subr.bf16.mxu0 0
        %1209 = vmatpush1.bf16.msra.mxu0 0
        %1210 = vmatprep.subr.bf16.mxu0 0
        %1211 = vmatpush1.bf16.msra.mxu0 0
        %1212 = vmatprep.subr.bf16.mxu0 0
        %1213 = vmatpush1.bf16.msra.mxu0 0
        %1214 = vmatprep.subr.bf16.mxu0 0
        %1215 = vmatpush1.bf16.msra.mxu0 0
        %1216 = vmatprep.subr.bf16.mxu0 0
        %1217 = vmatpush1.bf16.msra.mxu0 0
        %1218 = vmatprep.subr.bf16.mxu0 0
        %1219 = vmatpush1.bf16.msra.mxu0 0
        %1220 = vmatprep.subr.bf16.mxu0 0
        %1221 = vmatpush1.bf16.msra.mxu0 0
        %1222 = vmatprep.subr.bf16.mxu0 0
        %1223 = vmatpush1.bf16.msra.mxu0 0
        %1224 = vmatprep.mubr.bf16.mxu0 0
        %1225 = vmatmul.mubr.bf16.gmra.mrb[0].mxu0 %v1136
        %v1226 = vpop.f32.mrb[0].mxu0
        %v1227 = vadd.f32 0.0, %v1226
        %v1228 = vpop.f32.mrb[0].mxu0
        %v1229 = vpop.f32.mrb[0].mxu0
        %v1230 = vadd.f32 0.0, %v1229
        %v1231 = vpop.f32.mrb[0].mxu0
        %1232 = vmatprep.mubr.bf16.mxu0 0
        %1233 = vmatmul.mubr.bf16.gmra.mrb[0].mxu0 %v1137
        %v1234 = vpop.f32.mrb[0].mxu0
        %v1235 = vadd.f32 0.0, %v1234
        %v1236 = vpop.f32.mrb[0].mxu0
        %v1237 = vpop.f32.mrb[0].mxu0
        %v1238 = vadd.f32 0.0, %v1237
        %v1239 = vpop.f32.mrb[0].mxu0
        %1240 = vmatprep.mubr.bf16.mxu0 0
        %1241 = vmatmul.mubr.bf16.gmra.mrb[0].mxu0 %v1138
        %v1242 = vpop.f32.mrb[0].mxu0
        %v1243 = vadd.f32 0.0, %v1242
        %v1244 = vpop.f32.mrb[0].mxu0
        %v1245 = vpop.f32.mrb[0].mxu0
        %v1246 = vadd.f32 0.0, %v1245
        %v1247 = vpop.f32.mrb[0].mxu0
        %1248 = vmatprep.mubr.bf16.mxu0 0
        %1249 = vmatmul.mubr.bf16.gmra.mrb[0].mxu0 %v1139
        %v1250 = vpop.f32.mrb[0].mxu0
        %v1251 = vadd.f32 0.0, %v1250
        %v1252 = vpop.f32.mrb[0].mxu0
        %v1253 = vpop.f32.mrb[0].mxu0
        %v1254 = vpop.f32.mrb[0].mxu0
        %1255 = vdwg.mxu0
        %v1256 = vpack.c.b16 %v921, %v920
        %v1257 = vpack.c.b16 %v923, %v922
        %v1258 = vpack.c.b16 %v925, %v924
        %v1279 = vunpack.c.l.b16 %v1103
        %v1280 = vunpack.c.l.b16 %v1104
        %v1281 = vunpack.c.l.b16 %v1105
        %v1282 = vunpack.c.l.b16 %v1106
        %v1283 = vunpack.c.l.b16 %v1107
        %v1284 = vunpack.c.l.b16 %v1108
        %v1285 = vunpack.c.l.b16 %v1109
        %v1286 = vunpack.c.l.b16 %v1110
        %v1287 = vunpack.c.l.b16 %v1111
        %v1288 = vunpack.c.l.b16 %v1112
        %v1289 = vunpack.c.l.b16 %v1113
        %v1290 = vunpack.c.l.b16 %v1114
        %v1291 = vunpack.c.l.b16 %v1115
        %v1292 = vunpack.c.l.b16 %v1116
        %v1293 = vunpack.c.l.b16 %v1117
        %v1294 = vunpack.c.l.b16 %v1118
        %v1295 = vpack.c.b16 %v1280, %v1279
        %v1296 = vpack.c.b16 %v1282, %v1281
        %v1297 = vpack.c.b16 %v1284, %v1283
        %v1298 = vpack.c.b16 %v1286, %v1285
        %v1299 = vpack.c.b16 %v1288, %v1287
        %v1300 = vpack.c.b16 %v1290, %v1289
        %v1301 = vpack.c.b16 %v1292, %v1291
        %v1302 = vpack.c.b16 %v1294, %v1293
        %1311 = vmatprep.subr.bf16.mxu0 0
        %1312 = vmatpush1.bf16.msra.mxu0 %v1295
        %1313 = vmatprep.subr.bf16.mxu0 0
        %1314 = vmatpush1.bf16.msra.mxu0 %v1296
        %1315 = vmatprep.subr.bf16.mxu0 0
        %1316 = vmatpush1.bf16.msra.mxu0 %v1297
        %1317 = vmatprep.subr.bf16.mxu0 0
        %1318 = vmatpush1.bf16.msra.mxu0 %v1298
        %1319 = vmatprep.subr.bf16.mxu0 0
        %1320 = vmatpush1.bf16.msra.mxu0 %v1299
        %1321 = vmatprep.subr.bf16.mxu0 0
        %1322 = vmatpush1.bf16.msra.mxu0 %v1300
        %1323 = vmatprep.subr.bf16.mxu0 0
        %1324 = vmatpush1.bf16.msra.mxu0 %v1301
        %1325 = vmatprep.subr.bf16.mxu0 0
        %1326 = vmatpush1.bf16.msra.mxu0 %v1302
        %1327 = vmatprep.subr.bf16.mxu0 0
        %1328 = vmatpush1.bf16.msra.mxu0 0
        %1329 = vmatprep.subr.bf16.mxu0 0
        %1330 = vmatpush1.bf16.msra.mxu0 0
        %1331 = vmatprep.subr.bf16.mxu0 0
        %1332 = vmatpush1.bf16.msra.mxu0 0
        %1333 = vmatprep.subr.bf16.mxu0 0
        %1334 = vmatpush1.bf16.msra.mxu0 0
        %1335 = vmatprep.subr.bf16.mxu0 0
        %1336 = vmatpush1.bf16.msra.mxu0 0
        %1337 = vmatprep.subr.bf16.mxu0 0
        %1338 = vmatpush1.bf16.msra.mxu0 0
        %1339 = vmatprep.subr.bf16.mxu0 0
        %1340 = vmatpush1.bf16.msra.mxu0 0
        %1341 = vmatprep.subr.bf16.mxu0 0
        %1342 = vmatpush1.bf16.msra.mxu0 0
        %1343 = vmatprep.mubr.bf16.mxu0 0
        %1344 = vmatmul.mubr.bf16.gmra.mrb[0].mxu0 %v1256
        %v1345 = vpop.f32.mrb[0].mxu0
        %v1346 = vadd.f32 %v1227, %v1345
        %v1347 = vpop.f32.mrb[0].mxu0
        %v1348 = vpop.f32.mrb[0].mxu0
        %v1349 = vadd.f32 %v1230, %v1348
        %v1350 = vpop.f32.mrb[0].mxu0
        %1351 = vmatprep.mubr.bf16.mxu0 0
        %1352 = vmatmul.mubr.bf16.gmra.mrb[0].mxu0 %v1257
        %v1353 = vpop.f32.mrb[0].mxu0
        %v1354 = vadd.f32 %v1235, %v1353
        %v1355 = vpop.f32.mrb[0].mxu0
        %v1356 = vpop.f32.mrb[0].mxu0
        %v1357 = vadd.f32 %v1238, %v1356
        %v1358 = vpop.f32.mrb[0].mxu0
        %1359 = vmatprep.mubr.bf16.mxu0 0
        %1360 = vmatmul.mubr.bf16.gmra.mrb[0].mxu0 %v1258
        %v1361 = vpop.f32.mrb[0].mxu0
        %v1362 = vadd.f32 %v1243, %v1361
        %v1363 = vpop.f32.mrb[0].mxu0
        %v1364 = vpop.f32.mrb[0].mxu0
        %v1365 = vadd.f32 %v1246, %v1364
        %v1366 = vpop.f32.mrb[0].mxu0
        %1367 = vmatprep.mubr.bf16.mxu0 0
        %1368 = vmatmul.mubr.bf16.gmra.mrb[0].mxu0 %v956
        %v1369 = vpop.f32.mrb[0].mxu0
        %v1370 = vadd.f32 %v1251, %v1369
        %v1371 = vpop.f32.mrb[0].mxu0
        %v1372 = vpop.f32.mrb[0].mxu0
        %v1373 = vpop.f32.mrb[0].mxu0
        %1374 = vdwg.mxu0
        %s1375 = scalar_lea.vmem [#allocation6], 128
        %v1376 = vld [vmem:[%s1375] sm:$0xf]
        %v1377 = vld [vmem:[%s1375 + $0x4] sm:$0xf]
        %v1378 = vld [vmem:[%s1375 + $0x8] sm:$0xf]
        %v1379 = vld [vmem:[%s1375 + $0xc] sm:$0xf]
        %v1380 = vld [vmem:[%s1375 + $0x10] sm:$0xf]
        %v1381 = vld [vmem:[%s1375 + $0x14] sm:$0xf]
        %v1382 = vld [vmem:[%s1375 + $0x18] sm:$0xf]
        %v1383 = vld [vmem:[%s1375 + $0x1c] sm:$0xf]
        %v1384 = vld [vmem:[%s1375 + $0x20] sm:$0xf]
        %v1385 = vld [vmem:[%s1375 + $0x24] sm:$0xf]
        %v1386 = vld [vmem:[%s1375 + $0x28] sm:$0xf]
        %v1387 = vld [vmem:[%s1375 + $0x2c] sm:$0xf]
        %v1388 = vld [vmem:[%s1375 + $0x30] sm:$0xf]
        %v1389 = vld [vmem:[%s1375 + $0x34] sm:$0xf]
        %v1390 = vld [vmem:[%s1375 + $0x38] sm:$0xf]
        %v1391 = vld [vmem:[%s1375 + $0x3c] sm:$0xf]
        %v1399 = vunpack.c.l.b16 %v1088
        %v1400 = vunpack.c.l.b16 %v1089
        %v1401 = vunpack.c.l.b16 %v1090
        %v1402 = vunpack.c.l.b16 %v1091
        %v1403 = vunpack.c.l.b16 %v1092
        %v1404 = vunpack.c.l.b16 %v1093
        %v1405 = vunpack.c.l.b16 %v1094
        %v1406 = vpack.c.b16 %v1400, %v1399
        %v1407 = vpack.c.b16 %v1402, %v1401
        %v1408 = vpack.c.b16 %v1404, %v1403
        %v1409 = vpack.c.b16 %v1405, %v1405
        %v1430 = vunpack.c.l.b16 %v1376
        %v1431 = vunpack.c.l.b16 %v1377
        %v1432 = vunpack.c.l.b16 %v1378
        %v1433 = vunpack.c.l.b16 %v1379
        %v1434 = vunpack.c.l.b16 %v1380
        %v1435 = vunpack.c.l.b16 %v1381
        %v1436 = vunpack.c.l.b16 %v1382
        %v1437 = vunpack.c.l.b16 %v1383
        %v1438 = vunpack.c.l.b16 %v1384
        %v1439 = vunpack.c.l.b16 %v1385
        %v1440 = vunpack.c.l.b16 %v1386
        %v1441 = vunpack.c.l.b16 %v1387
        %v1442 = vunpack.c.l.b16 %v1388
        %v1443 = vunpack.c.l.b16 %v1389
        %v1444 = vunpack.c.l.b16 %v1390
        %v1445 = vunpack.c.l.b16 %v1391
        %v1446 = vpack.c.b16 %v1431, %v1430
        %v1447 = vpack.c.b16 %v1433, %v1432
        %v1448 = vpack.c.b16 %v1435, %v1434
        %v1449 = vpack.c.b16 %v1437, %v1436
        %v1450 = vpack.c.b16 %v1439, %v1438
        %v1451 = vpack.c.b16 %v1441, %v1440
        %v1452 = vpack.c.b16 %v1443, %v1442
        %v1453 = vpack.c.b16 %v1445, %v1444
        %1462 = vmatprep.subr.bf16.mxu0 0
        %1463 = vmatpush1.bf16.msra.mxu0 %v1446
        %1464 = vmatprep.subr.bf16.mxu0 0
        %1465 = vmatpush1.bf16.msra.mxu0 %v1447
        %1466 = vmatprep.subr.bf16.mxu0 0
        %1467 = vmatpush1.bf16.msra.mxu0 %v1448
        %1468 = vmatprep.subr.bf16.mxu0 0
        %1469 = vmatpush1.bf16.msra.mxu0 %v1449
        %1470 = vmatprep.subr.bf16.mxu0 0
        %1471 = vmatpush1.bf16.msra.mxu0 %v1450
        %1472 = vmatprep.subr.bf16.mxu0 0
        %1473 = vmatpush1.bf16.msra.mxu0 %v1451
        %1474 = vmatprep.subr.bf16.mxu0 0
        %1475 = vmatpush1.bf16.msra.mxu0 %v1452
        %1476 = vmatprep.subr.bf16.mxu0 0
        %1477 = vmatpush1.bf16.msra.mxu0 %v1453
        %1478 = vmatprep.subr.bf16.mxu0 0
        %1479 = vmatpush1.bf16.msra.mxu0 0
        %1480 = vmatprep.subr.bf16.mxu0 0
        %1481 = vmatpush1.bf16.msra.mxu0 0
        %1482 = vmatprep.subr.bf16.mxu0 0
        %1483 = vmatpush1.bf16.msra.mxu0 0
        %1484 = vmatprep.subr.bf16.mxu0 0
        %1485 = vmatpush1.bf16.msra.mxu0 0
        %1486 = vmatprep.subr.bf16.mxu0 0
        %1487 = vmatpush1.bf16.msra.mxu0 0
        %1488 = vmatprep.subr.bf16.mxu0 0
        %1489 = vmatpush1.bf16.msra.mxu0 0
        %1490 = vmatprep.subr.bf16.mxu0 0
        %1491 = vmatpush1.bf16.msra.mxu0 0
        %1492 = vmatprep.subr.bf16.mxu0 0
        %1493 = vmatpush1.bf16.msra.mxu0 0
        %1494 = vmatprep.mubr.bf16.mxu0 0
        %1495 = vmatmul.mubr.bf16.gmra.mrb[0].mxu0 %v1406
        %v1496 = vpop.f32.mrb[0].mxu0
        %v1497 = vadd.f32 0.0, %v1496
        %v1498 = vpop.f32.mrb[0].mxu0
        %v1499 = vpop.f32.mrb[0].mxu0
        %v1500 = vadd.f32 0.0, %v1499
        %v1501 = vpop.f32.mrb[0].mxu0
        %1502 = vmatprep.mubr.bf16.mxu0 0
        %1503 = vmatmul.mubr.bf16.gmra.mrb[0].mxu0 %v1407
        %v1504 = vpop.f32.mrb[0].mxu0
        %v1505 = vadd.f32 0.0, %v1504
        %v1506 = vpop.f32.mrb[0].mxu0
        %v1507 = vpop.f32.mrb[0].mxu0
        %v1508 = vadd.f32 0.0, %v1507
        %v1509 = vpop.f32.mrb[0].mxu0
        %1510 = vmatprep.mubr.bf16.mxu0 0
        %1511 = vmatmul.mubr.bf16.gmra.mrb[0].mxu0 %v1408
        %v1512 = vpop.f32.mrb[0].mxu0
        %v1513 = vadd.f32 0.0, %v1512
        %v1514 = vpop.f32.mrb[0].mxu0
        %v1515 = vpop.f32.mrb[0].mxu0
        %v1516 = vadd.f32 0.0, %v1515
        %v1517 = vpop.f32.mrb[0].mxu0
        %1518 = vmatprep.mubr.bf16.mxu0 0
        %1519 = vmatmul.mubr.bf16.gmra.mrb[0].mxu0 %v1409
        %v1520 = vpop.f32.mrb[0].mxu0
        %v1521 = vadd.f32 0.0, %v1520
        %v1522 = vpop.f32.mrb[0].mxu0
        %v1523 = vpop.f32.mrb[0].mxu0
        %v1524 = vpop.f32.mrb[0].mxu0
        %1525 = vdwg.mxu0
        %v1526 = vadd.f32 %v1346, %v1497
        %v1527 = vadd.f32 %v1349, %v1500
        %v1528 = vadd.f32 %v1354, %v1505
        %v1529 = vadd.f32 %v1357, %v1508
        %v1530 = vadd.f32 %v1362, %v1513
        %v1531 = vadd.f32 %v1365, %v1516
        %v1532 = vadd.f32 %v1370, %v1521
        %s1533 = scalar_lea.vmem [#allocation6], 192
        %v1534 = vld [vmem:[%s1533] sm:$0xf]
        %v1535 = vld [vmem:[%s1533 + $0x4] sm:$0xf]
        %v1536 = vld [vmem:[%s1533 + $0x8] sm:$0xf]
        %v1537 = vld [vmem:[%s1533 + $0xc] sm:$0xf]
        %v1538 = vld [vmem:[%s1533 + $0x10] sm:$0xf]
        %v1539 = vld [vmem:[%s1533 + $0x14] sm:$0xf]
        %v1540 = vld [vmem:[%s1533 + $0x18] sm:$0xf]
        %v1541 = vld [vmem:[%s1533 + $0x1c] sm:$0xf]
        %v1542 = vld [vmem:[%s1533 + $0x20] sm:$0xf]
        %v1543 = vld [vmem:[%s1533 + $0x24] sm:$0xf]
        %v1544 = vld [vmem:[%s1533 + $0x28] sm:$0xf]
        %v1545 = vld [vmem:[%s1533 + $0x2c] sm:$0xf]
        %v1546 = vld [vmem:[%s1533 + $0x30] sm:$0xf]
        %v1547 = vld [vmem:[%s1533 + $0x34] sm:$0xf]
        %v1548 = vld [vmem:[%s1533 + $0x38] sm:$0xf]
        %v1549 = vld [vmem:[%s1533 + $0x3c] sm:$0xf]
        %v1550 = vpack.c.b16 %v937, %v936
        %v1551 = vpack.c.b16 %v939, %v938
        %v1552 = vpack.c.b16 %v941, %v940
        %v1573 = vunpack.c.l.b16 %v1534
        %v1574 = vunpack.c.l.b16 %v1535
        %v1575 = vunpack.c.l.b16 %v1536
        %v1576 = vunpack.c.l.b16 %v1537
        %v1577 = vunpack.c.l.b16 %v1538
        %v1578 = vunpack.c.l.b16 %v1539
        %v1579 = vunpack.c.l.b16 %v1540
        %v1580 = vunpack.c.l.b16 %v1541
        %v1581 = vunpack.c.l.b16 %v1542
        %v1582 = vunpack.c.l.b16 %v1543
        %v1583 = vunpack.c.l.b16 %v1544
        %v1584 = vunpack.c.l.b16 %v1545
        %v1585 = vunpack.c.l.b16 %v1546
        %v1586 = vunpack.c.l.b16 %v1547
        %v1587 = vunpack.c.l.b16 %v1548
        %v1588 = vunpack.c.l.b16 %v1549
        %v1589 = vpack.c.b16 %v1574, %v1573
        %v1590 = vpack.c.b16 %v1576, %v1575
        %v1591 = vpack.c.b16 %v1578, %v1577
        %v1592 = vpack.c.b16 %v1580, %v1579
        %v1593 = vpack.c.b16 %v1582, %v1581
        %v1594 = vpack.c.b16 %v1584, %v1583
        %v1595 = vpack.c.b16 %v1586, %v1585
        %v1596 = vpack.c.b16 %v1588, %v1587
        %1605 = vmatprep.subr.bf16.mxu0 0
        %1606 = vmatpush1.bf16.msra.mxu0 %v1589
        %1607 = vmatprep.subr.bf16.mxu0 0
        %1608 = vmatpush1.bf16.msra.mxu0 %v1590
        %1609 = vmatprep.subr.bf16.mxu0 0
        %1610 = vmatpush1.bf16.msra.mxu0 %v1591
        %1611 = vmatprep.subr.bf16.mxu0 0
        %1612 = vmatpush1.bf16.msra.mxu0 %v1592
        %1613 = vmatprep.subr.bf16.mxu0 0
        %1614 = vmatpush1.bf16.msra.mxu0 %v1593
        %1615 = vmatprep.subr.bf16.mxu0 0
        %1616 = vmatpush1.bf16.msra.mxu0 %v1594
        %1617 = vmatprep.subr.bf16.mxu0 0
        %1618 = vmatpush1.bf16.msra.mxu0 %v1595
        %1619 = vmatprep.subr.bf16.mxu0 0
        %1620 = vmatpush1.bf16.msra.mxu0 %v1596
        %1621 = vmatprep.subr.bf16.mxu0 0
        %1622 = vmatpush1.bf16.msra.mxu0 0
        %1623 = vmatprep.subr.bf16.mxu0 0
        %1624 = vmatpush1.bf16.msra.mxu0 0
        %1625 = vmatprep.subr.bf16.mxu0 0
        %1626 = vmatpush1.bf16.msra.mxu0 0
        %1627 = vmatprep.subr.bf16.mxu0 0
        %1628 = vmatpush1.bf16.msra.mxu0 0
        %1629 = vmatprep.subr.bf16.mxu0 0
        %1630 = vmatpush1.bf16.msra.mxu0 0
        %1631 = vmatprep.subr.bf16.mxu0 0
        %1632 = vmatpush1.bf16.msra.mxu0 0
        %1633 = vmatprep.subr.bf16.mxu0 0
        %1634 = vmatpush1.bf16.msra.mxu0 0
        %1635 = vmatprep.subr.bf16.mxu0 0
        %1636 = vmatpush1.bf16.msra.mxu0 0
        %1637 = vmatprep.mubr.bf16.mxu0 0
        %1638 = vmatmul.mubr.bf16.gmra.mrb[0].mxu0 %v1550
        %v1639 = vpop.f32.mrb[0].mxu0
        %v1640 = vadd.f32 0.0, %v1639
        %v1641 = vpop.f32.mrb[0].mxu0
        %v1642 = vpop.f32.mrb[0].mxu0
        %v1643 = vadd.f32 0.0, %v1642
        %v1644 = vpop.f32.mrb[0].mxu0
        %1645 = vmatprep.mubr.bf16.mxu0 0
        %1646 = vmatmul.mubr.bf16.gmra.mrb[0].mxu0 %v1551
        %v1647 = vpop.f32.mrb[0].mxu0
        %v1648 = vadd.f32 0.0, %v1647
        %v1649 = vpop.f32.mrb[0].mxu0
        %v1650 = vpop.f32.mrb[0].mxu0
        %v1651 = vadd.f32 0.0, %v1650
        %v1652 = vpop.f32.mrb[0].mxu0
        %1653 = vmatprep.mubr.bf16.mxu0 0
        %1654 = vmatmul.mubr.bf16.gmra.mrb[0].mxu0 %v1552
        %v1655 = vpop.f32.mrb[0].mxu0
        %v1656 = vadd.f32 0.0, %v1655
        %v1657 = vpop.f32.mrb[0].mxu0
        %v1658 = vpop.f32.mrb[0].mxu0
        %v1659 = vadd.f32 0.0, %v1658
        %v1660 = vpop.f32.mrb[0].mxu0
        %1661 = vmatprep.mubr.bf16.mxu0 0
        %1662 = vmatmul.mubr.bf16.gmra.mrb[0].mxu0 %v964
        %v1663 = vpop.f32.mrb[0].mxu0
        %v1664 = vadd.f32 0.0, %v1663
        %v1665 = vpop.f32.mrb[0].mxu0
        %v1666 = vpop.f32.mrb[0].mxu0
        %v1667 = vpop.f32.mrb[0].mxu0
        %1668 = vdwg.mxu0
        %v1669 = vadd.f32 %v1526, %v1640
        %v1670 = vadd.f32 %v1527, %v1643
        %v1671 = vadd.f32 %v1528, %v1648
        %v1672 = vadd.f32 %v1529, %v1651
        %v1673 = vadd.f32 %v1530, %v1656
        %v1674 = vadd.f32 %v1531, %v1659
        %v1675 = vadd.f32 %v1532, %v1664
        %s1676 = scalar_lea.vmem [#allocation6], 256
        %v1677 = vld [vmem:[%s1676] sm:$0xf]
        %v1678 = vld [vmem:[%s1676 + $0x4] sm:$0xf]
        %v1679 = vld [vmem:[%s1676 + $0x8] sm:$0xf]
        %v1680 = vld [vmem:[%s1676 + $0xc] sm:$0xf]
        %v1681 = vld [vmem:[%s1676 + $0x10] sm:$0xf]
        %v1682 = vld [vmem:[%s1676 + $0x14] sm:$0xf]
        %v1683 = vld [vmem:[%s1676 + $0x18] sm:$0xf]
        %v1684 = vld [vmem:[%s1676 + $0x1c] sm:$0xf]
        %v1685 = vld [vmem:[%s1676 + $0x20] sm:$0xf]
        %v1686 = vld [vmem:[%s1676 + $0x24] sm:$0xf]
        %v1687 = vld [vmem:[%s1676 + $0x28] sm:$0xf]
        %v1688 = vld [vmem:[%s1676 + $0x2c] sm:$0xf]
        %v1689 = vld [vmem:[%s1676 + $0x30] sm:$0xf]
        %v1690 = vld [vmem:[%s1676 + $0x34] sm:$0xf]
        %v1691 = vld [vmem:[%s1676 + $0x38] sm:$0xf]
        %v1692 = vld [vmem:[%s1676 + $0x3c] sm:$0xf]
        %v1693 = vpack.c.b16 %v944, %v943
        %v1694 = vpack.c.b16 %v946, %v945
        %v1695 = vpack.c.b16 %v948, %v947
        %v1696 = vpack.c.b16 %v949, %v949
        %v1717 = vunpack.c.l.b16 %v1677
        %v1718 = vunpack.c.l.b16 %v1678
        %v1719 = vunpack.c.l.b16 %v1679
        %v1720 = vunpack.c.l.b16 %v1680
        %v1721 = vunpack.c.l.b16 %v1681
        %v1722 = vunpack.c.l.b16 %v1682
        %v1723 = vunpack.c.l.b16 %v1683
        %v1724 = vunpack.c.l.b16 %v1684
        %v1725 = vunpack.c.l.b16 %v1685
        %v1726 = vunpack.c.l.b16 %v1686
        %v1727 = vunpack.c.l.b16 %v1687
        %v1728 = vunpack.c.l.b16 %v1688
        %v1729 = vunpack.c.l.b16 %v1689
        %v1730 = vunpack.c.l.b16 %v1690
        %v1731 = vunpack.c.l.b16 %v1691
        %v1732 = vunpack.c.l.b16 %v1692
        %v1733 = vpack.c.b16 %v1718, %v1717
        %v1734 = vpack.c.b16 %v1720, %v1719
        %v1735 = vpack.c.b16 %v1722, %v1721
        %v1736 = vpack.c.b16 %v1724, %v1723
        %v1737 = vpack.c.b16 %v1726, %v1725
        %v1738 = vpack.c.b16 %v1728, %v1727
        %v1739 = vpack.c.b16 %v1730, %v1729
        %v1740 = vpack.c.b16 %v1732, %v1731
        %1749 = vmatprep.subr.bf16.mxu0 0
        %1750 = vmatpush1.bf16.msra.mxu0 %v1733
        %1751 = vmatprep.subr.bf16.mxu0 0
        %1752 = vmatpush1.bf16.msra.mxu0 %v1734
        %1753 = vmatprep.subr.bf16.mxu0 0
        %1754 = vmatpush1.bf16.msra.mxu0 %v1735
        %1755 = vmatprep.subr.bf16.mxu0 0
        %1756 = vmatpush1.bf16.msra.mxu0 %v1736
        %1757 = vmatprep.subr.bf16.mxu0 0
        %1758 = vmatpush1.bf16.msra.mxu0 %v1737
        %1759 = vmatprep.subr.bf16.mxu0 0
        %1760 = vmatpush1.bf16.msra.mxu0 %v1738
        %1761 = vmatprep.subr.bf16.mxu0 0
        %1762 = vmatpush1.bf16.msra.mxu0 %v1739
        %1763 = vmatprep.subr.bf16.mxu0 0
        %1764 = vmatpush1.bf16.msra.mxu0 %v1740
        %1765 = vmatprep.subr.bf16.mxu0 0
        %1766 = vmatpush1.bf16.msra.mxu0 0
        %1767 = vmatprep.subr.bf16.mxu0 0
        %1768 = vmatpush1.bf16.msra.mxu0 0
        %1769 = vmatprep.subr.bf16.mxu0 0
        %1770 = vmatpush1.bf16.msra.mxu0 0
        %1771 = vmatprep.subr.bf16.mxu0 0
        %1772 = vmatpush1.bf16.msra.mxu0 0
        %1773 = vmatprep.subr.bf16.mxu0 0
        %1774 = vmatpush1.bf16.msra.mxu0 0
        %1775 = vmatprep.subr.bf16.mxu0 0
        %1776 = vmatpush1.bf16.msra.mxu0 0
        %1777 = vmatprep.subr.bf16.mxu0 0
        %1778 = vmatpush1.bf16.msra.mxu0 0
        %1779 = vmatprep.subr.bf16.mxu0 0
        %1780 = vmatpush1.bf16.msra.mxu0 0
        %1781 = vmatprep.mubr.bf16.mxu0 0
        %1782 = vmatmul.mubr.bf16.gmra.mrb[0].mxu0 %v1693
        %v1783 = vpop.f32.mrb[0].mxu0
        %v1784 = vadd.f32 0.0, %v1783
        %v1785 = vpop.f32.mrb[0].mxu0
        %v1786 = vpop.f32.mrb[0].mxu0
        %v1787 = vadd.f32 0.0, %v1786
        %v1788 = vpop.f32.mrb[0].mxu0
        %1789 = vmatprep.mubr.bf16.mxu0 0
        %1790 = vmatmul.mubr.bf16.gmra.mrb[0].mxu0 %v1694
        %v1791 = vpop.f32.mrb[0].mxu0
        %v1792 = vadd.f32 0.0, %v1791
        %v1793 = vpop.f32.mrb[0].mxu0
        %v1794 = vpop.f32.mrb[0].mxu0
        %v1795 = vadd.f32 0.0, %v1794
        %v1796 = vpop.f32.mrb[0].mxu0
        %1797 = vmatprep.mubr.bf16.mxu0 0
        %1798 = vmatmul.mubr.bf16.gmra.mrb[0].mxu0 %v1695
        %v1799 = vpop.f32.mrb[0].mxu0
        %v1800 = vadd.f32 0.0, %v1799
        %v1801 = vpop.f32.mrb[0].mxu0
        %v1802 = vpop.f32.mrb[0].mxu0
        %v1803 = vadd.f32 0.0, %v1802
        %v1804 = vpop.f32.mrb[0].mxu0
        %1805 = vmatprep.mubr.bf16.mxu0 0
        %1806 = vmatmul.mubr.bf16.gmra.mrb[0].mxu0 %v1696
        %v1807 = vpop.f32.mrb[0].mxu0
        %v1808 = vadd.f32 0.0, %v1807
        %v1809 = vpop.f32.mrb[0].mxu0
        %v1810 = vpop.f32.mrb[0].mxu0
        %v1811 = vpop.f32.mrb[0].mxu0
        %1812 = vdwg.mxu0
        %v1813 = vadd.f32 %v1669, %v1784
        %v1814 = vadd.f32 %v1670, %v1787
        %v1815 = vadd.f32 %v1671, %v1792
        %v1816 = vadd.f32 %v1672, %v1795
        %v1817 = vadd.f32 %v1673, %v1800
        %v1818 = vadd.f32 %v1674, %v1803
        %v1819 = vadd.f32 %v1675, %v1808
        %s1820 = scalar_lea.vmem [#allocation6], 320
        %v1821 = vld [vmem:[%s1820] sm:$0xf]
        %v1822 = vld [vmem:[%s1820 + $0x4] sm:$0xf]
        %v1823 = vld [vmem:[%s1820 + $0x8] sm:$0xf]
        %v1824 = vld [vmem:[%s1820 + $0xc] sm:$0xf]
        %v1825 = vld [vmem:[%s1820 + $0x10] sm:$0xf]
        %v1826 = vld [vmem:[%s1820 + $0x14] sm:$0xf]
        %v1827 = vld [vmem:[%s1820 + $0x18] sm:$0xf]
        %v1828 = vld [vmem:[%s1820 + $0x1c] sm:$0xf]
        %v1829 = vld [vmem:[%s1820 + $0x20] sm:$0xf]
        %v1830 = vld [vmem:[%s1820 + $0x24] sm:$0xf]
        %v1831 = vld [vmem:[%s1820 + $0x28] sm:$0xf]
        %v1832 = vld [vmem:[%s1820 + $0x2c] sm:$0xf]
        %v1833 = vld [vmem:[%s1820 + $0x30] sm:$0xf]
        %v1834 = vld [vmem:[%s1820 + $0x34] sm:$0xf]
        %v1835 = vld [vmem:[%s1820 + $0x38] sm:$0xf]
        %v1836 = vld [vmem:[%s1820 + $0x3c] sm:$0xf]
        %v1844 = vunpack.c.l.b16 %v1096
        %v1845 = vunpack.c.l.b16 %v1097
        %v1846 = vunpack.c.l.b16 %v1098
        %v1847 = vunpack.c.l.b16 %v1099
        %v1848 = vunpack.c.l.b16 %v1100
        %v1849 = vunpack.c.l.b16 %v1101
        %v1850 = vunpack.c.l.b16 %v1102
        %v1851 = vpack.c.b16 %v1845, %v1844
        %v1852 = vpack.c.b16 %v1847, %v1846
        %v1853 = vpack.c.b16 %v1849, %v1848
        %v1854 = vpack.c.b16 %v1850, %v1850
        %v1875 = vunpack.c.l.b16 %v1821
        %v1876 = vunpack.c.l.b16 %v1822
        %v1877 = vunpack.c.l.b16 %v1823
        %v1878 = vunpack.c.l.b16 %v1824
        %v1879 = vunpack.c.l.b16 %v1825
        %v1880 = vunpack.c.l.b16 %v1826
        %v1881 = vunpack.c.l.b16 %v1827
        %v1882 = vunpack.c.l.b16 %v1828
        %v1883 = vunpack.c.l.b16 %v1829
        %v1884 = vunpack.c.l.b16 %v1830
        %v1885 = vunpack.c.l.b16 %v1831
        %v1886 = vunpack.c.l.b16 %v1832
        %v1887 = vunpack.c.l.b16 %v1833
        %v1888 = vunpack.c.l.b16 %v1834
        %v1889 = vunpack.c.l.b16 %v1835
        %v1890 = vunpack.c.l.b16 %v1836
        %v1891 = vpack.c.b16 %v1876, %v1875
        %v1892 = vpack.c.b16 %v1878, %v1877
        %v1893 = vpack.c.b16 %v1880, %v1879
        %v1894 = vpack.c.b16 %v1882, %v1881
        %v1895 = vpack.c.b16 %v1884, %v1883
        %v1896 = vpack.c.b16 %v1886, %v1885
        %v1897 = vpack.c.b16 %v1888, %v1887
        %v1898 = vpack.c.b16 %v1890, %v1889
        %1907 = vmatprep.subr.bf16.mxu0 0
        %1908 = vmatpush1.bf16.msra.mxu0 %v1891
        %1909 = vmatprep.subr.bf16.mxu0 0
        %1910 = vmatpush1.bf16.msra.mxu0 %v1892
        %1911 = vmatprep.subr.bf16.mxu0 0
        %1912 = vmatpush1.bf16.msra.mxu0 %v1893
        %1913 = vmatprep.subr.bf16.mxu0 0
        %1914 = vmatpush1.bf16.msra.mxu0 %v1894
        %1915 = vmatprep.subr.bf16.mxu0 0
        %1916 = vmatpush1.bf16.msra.mxu0 %v1895
        %1917 = vmatprep.subr.bf16.mxu0 0
        %1918 = vmatpush1.bf16.msra.mxu0 %v1896
        %1919 = vmatprep.subr.bf16.mxu0 0
        %1920 = vmatpush1.bf16.msra.mxu0 %v1897
        %1921 = vmatprep.subr.bf16.mxu0 0
        %1922 = vmatpush1.bf16.msra.mxu0 %v1898
        %1923 = vmatprep.subr.bf16.mxu0 0
        %1924 = vmatpush1.bf16.msra.mxu0 0
        %1925 = vmatprep.subr.bf16.mxu0 0
        %1926 = vmatpush1.bf16.msra.mxu0 0
        %1927 = vmatprep.subr.bf16.mxu0 0
        %1928 = vmatpush1.bf16.msra.mxu0 0
        %1929 = vmatprep.subr.bf16.mxu0 0
        %1930 = vmatpush1.bf16.msra.mxu0 0
        %1931 = vmatprep.subr.bf16.mxu0 0
        %1932 = vmatpush1.bf16.msra.mxu0 0
        %1933 = vmatprep.subr.bf16.mxu0 0
        %1934 = vmatpush1.bf16.msra.mxu0 0
        %1935 = vmatprep.subr.bf16.mxu0 0
        %1936 = vmatpush1.bf16.msra.mxu0 0
        %1937 = vmatprep.subr.bf16.mxu0 0
        %1938 = vmatpush1.bf16.msra.mxu0 0
        %1939 = vmatprep.mubr.bf16.mxu0 0
        %1940 = vmatmul.mubr.bf16.gmra.mrb[0].mxu0 %v1851
        %v1941 = vpop.f32.mrb[0].mxu0
        %v1942 = vadd.f32 0.0, %v1941
        %v1943 = vpop.f32.mrb[0].mxu0
        %v1944 = vpop.f32.mrb[0].mxu0
        %v1945 = vadd.f32 0.0, %v1944
        %v1946 = vpop.f32.mrb[0].mxu0
        %1947 = vmatprep.mubr.bf16.mxu0 0
        %1948 = vmatmul.mubr.bf16.gmra.mrb[0].mxu0 %v1852
        %v1949 = vpop.f32.mrb[0].mxu0
        %v1950 = vadd.f32 0.0, %v1949
        %v1951 = vpop.f32.mrb[0].mxu0
        %v1952 = vpop.f32.mrb[0].mxu0
        %v1953 = vadd.f32 0.0, %v1952
        %v1954 = vpop.f32.mrb[0].mxu0
        %1955 = vmatprep.mubr.bf16.mxu0 0
        %1956 = vmatmul.mubr.bf16.gmra.mrb[0].mxu0 %v1853
        %v1957 = vpop.f32.mrb[0].mxu0
        %v1958 = vadd.f32 0.0, %v1957
        %v1959 = vpop.f32.mrb[0].mxu0
        %v1960 = vpop.f32.mrb[0].mxu0
        %v1961 = vadd.f32 0.0, %v1960
        %v1962 = vpop.f32.mrb[0].mxu0
        %1963 = vmatprep.mubr.bf16.mxu0 0
        %1964 = vmatmul.mubr.bf16.gmra.mrb[0].mxu0 %v1854
        %v1965 = vpop.f32.mrb[0].mxu0
        %v1966 = vadd.f32 0.0, %v1965
        %v1967 = vpop.f32.mrb[0].mxu0
        %v1968 = vpop.f32.mrb[0].mxu0
        %v1969 = vpop.f32.mrb[0].mxu0
        %1970 = vdwg.mxu0
        %v1971 = vadd.f32 %v1813, %v1942
        %v1972 = vadd.f32 %v1814, %v1945
        %v1973 = vadd.f32 %v1815, %v1950
        %v1974 = vadd.f32 %v1816, %v1953
        %v1975 = vadd.f32 %v1817, %v1958
        %v1976 = vadd.f32 %v1818, %v1961
        %v1977 = vadd.f32 %v1819, %v1966
        %s1978 = scalar_lea.vmem [#allocation6], 384
        %v1979 = vld [vmem:[%s1978] sm:$0xf]
        %v1980 = vld [vmem:[%s1978 + $0x4] sm:$0xf]
        %v1981 = vld [vmem:[%s1978 + $0x8] sm:$0xf]
        %v1982 = vld [vmem:[%s1978 + $0xc] sm:$0xf]
        %v1983 = vld [vmem:[%s1978 + $0x10] sm:$0xf]
        %v1984 = vld [vmem:[%s1978 + $0x14] sm:$0xf]
        %v1985 = vld [vmem:[%s1978 + $0x18] sm:$0xf]
        %v1986 = vld [vmem:[%s1978 + $0x1c] sm:$0xf]
        %v1987 = vld [vmem:[%s1978 + $0x20] sm:$0xf]
        %v1988 = vld [vmem:[%s1978 + $0x24] sm:$0xf]
        %v1989 = vld [vmem:[%s1978 + $0x28] sm:$0xf]
        %v1990 = vld [vmem:[%s1978 + $0x2c] sm:$0xf]
        %v1991 = vld [vmem:[%s1978 + $0x30] sm:$0xf]
        %v1992 = vld [vmem:[%s1978 + $0x34] sm:$0xf]
        %v1993 = vld [vmem:[%s1978 + $0x38] sm:$0xf]
        %v1994 = vld [vmem:[%s1978 + $0x3c] sm:$0xf]
        %v1995 = vpack.c.b16 %v922, %v921
        %v1996 = vpack.c.b16 %v924, %v923
        %v1997 = vpack.c.b16 %v926, %v925
        %v2018 = vunpack.c.l.b16 %v1979
        %v2019 = vunpack.c.l.b16 %v1980
        %v2020 = vunpack.c.l.b16 %v1981
        %v2021 = vunpack.c.l.b16 %v1982
        %v2022 = vunpack.c.l.b16 %v1983
        %v2023 = vunpack.c.l.b16 %v1984
        %v2024 = vunpack.c.l.b16 %v1985
        %v2025 = vunpack.c.l.b16 %v1986
        %v2026 = vunpack.c.l.b16 %v1987
        %v2027 = vunpack.c.l.b16 %v1988
        %v2028 = vunpack.c.l.b16 %v1989
        %v2029 = vunpack.c.l.b16 %v1990
        %v2030 = vunpack.c.l.b16 %v1991
        %v2031 = vunpack.c.l.b16 %v1992
        %v2032 = vunpack.c.l.b16 %v1993
        %v2033 = vunpack.c.l.b16 %v1994
        %v2034 = vpack.c.b16 %v2019, %v2018
        %v2035 = vpack.c.b16 %v2021, %v2020
        %v2036 = vpack.c.b16 %v2023, %v2022
        %v2037 = vpack.c.b16 %v2025, %v2024
        %v2038 = vpack.c.b16 %v2027, %v2026
        %v2039 = vpack.c.b16 %v2029, %v2028
        %v2040 = vpack.c.b16 %v2031, %v2030
        %v2041 = vpack.c.b16 %v2033, %v2032
        %2050 = vmatprep.subr.bf16.mxu0 0
        %2051 = vmatpush1.bf16.msra.mxu0 %v2034
        %2052 = vmatprep.subr.bf16.mxu0 0
        %2053 = vmatpush1.bf16.msra.mxu0 %v2035
        %2054 = vmatprep.subr.bf16.mxu0 0
        %2055 = vmatpush1.bf16.msra.mxu0 %v2036
        %2056 = vmatprep.subr.bf16.mxu0 0
        %2057 = vmatpush1.bf16.msra.mxu0 %v2037
        %2058 = vmatprep.subr.bf16.mxu0 0
        %2059 = vmatpush1.bf16.msra.mxu0 %v2038
        %2060 = vmatprep.subr.bf16.mxu0 0
        %2061 = vmatpush1.bf16.msra.mxu0 %v2039
        %2062 = vmatprep.subr.bf16.mxu0 0
        %2063 = vmatpush1.bf16.msra.mxu0 %v2040
        %2064 = vmatprep.subr.bf16.mxu0 0
        %2065 = vmatpush1.bf16.msra.mxu0 %v2041
        %2066 = vmatprep.subr.bf16.mxu0 0
        %2067 = vmatpush1.bf16.msra.mxu0 0
        %2068 = vmatprep.subr.bf16.mxu0 0
        %2069 = vmatpush1.bf16.msra.mxu0 0
        %2070 = vmatprep.subr.bf16.mxu0 0
        %2071 = vmatpush1.bf16.msra.mxu0 0
        %2072 = vmatprep.subr.bf16.mxu0 0
        %2073 = vmatpush1.bf16.msra.mxu0 0
        %2074 = vmatprep.subr.bf16.mxu0 0
        %2075 = vmatpush1.bf16.msra.mxu0 0
        %2076 = vmatprep.subr.bf16.mxu0 0
        %2077 = vmatpush1.bf16.msra.mxu0 0
        %2078 = vmatprep.subr.bf16.mxu0 0
        %2079 = vmatpush1.bf16.msra.mxu0 0
        %2080 = vmatprep.subr.bf16.mxu0 0
        %2081 = vmatpush1.bf16.msra.mxu0 0
        %2082 = vmatprep.mubr.bf16.mxu0 0
        %2083 = vmatmul.mubr.bf16.gmra.mrb[0].mxu0 %v1995
        %v2084 = vpop.f32.mrb[0].mxu0
        %v2085 = vadd.f32 0.0, %v2084
        %v2086 = vpop.f32.mrb[0].mxu0
        %v2087 = vpop.f32.mrb[0].mxu0
        %v2088 = vadd.f32 0.0, %v2087
        %v2089 = vpop.f32.mrb[0].mxu0
        %2090 = vmatprep.mubr.bf16.mxu0 0
        %2091 = vmatmul.mubr.bf16.gmra.mrb[0].mxu0 %v1996
        %v2092 = vpop.f32.mrb[0].mxu0
        %v2093 = vadd.f32 0.0, %v2092
        %v2094 = vpop.f32.mrb[0].mxu0
        %v2095 = vpop.f32.mrb[0].mxu0
        %v2096 = vadd.f32 0.0, %v2095
        %v2097 = vpop.f32.mrb[0].mxu0
        %2098 = vmatprep.mubr.bf16.mxu0 0
        %2099 = vmatmul.mubr.bf16.gmra.mrb[0].mxu0 %v1997
        %v2100 = vpop.f32.mrb[0].mxu0
        %v2101 = vadd.f32 0.0, %v2100
        %v2102 = vpop.f32.mrb[0].mxu0
        %v2103 = vpop.f32.mrb[0].mxu0
        %v2104 = vadd.f32 0.0, %v2103
        %v2105 = vpop.f32.mrb[0].mxu0
        %2106 = vmatprep.mubr.bf16.mxu0 0
        %2107 = vmatmul.mubr.bf16.gmra.mrb[0].mxu0 %v957
        %v2108 = vpop.f32.mrb[0].mxu0
        %v2109 = vadd.f32 0.0, %v2108
        %v2110 = vpop.f32.mrb[0].mxu0
        %v2111 = vpop.f32.mrb[0].mxu0
        %v2112 = vpop.f32.mrb[0].mxu0
        %2113 = vdwg.mxu0
        %v2114 = vadd.f32 %v1971, %v2085
        %v2115 = vadd.f32 %v1972, %v2088
        %v2116 = vadd.f32 %v1973, %v2093
        %v2117 = vadd.f32 %v1974, %v2096
        %v2118 = vadd.f32 %v1975, %v2101
        %v2119 = vadd.f32 %v1976, %v2104
        %v2120 = vadd.f32 %v1977, %v2109
        %s2121 = scalar_lea.vmem [#allocation6], 448
        %v2122 = vld [vmem:[%s2121] sm:$0xf]
        %v2123 = vld [vmem:[%s2121 + $0x4] sm:$0xf]
        %v2124 = vld [vmem:[%s2121 + $0x8] sm:$0xf]
        %v2125 = vld [vmem:[%s2121 + $0xc] sm:$0xf]
        %v2126 = vld [vmem:[%s2121 + $0x10] sm:$0xf]
        %v2127 = vld [vmem:[%s2121 + $0x14] sm:$0xf]
        %v2128 = vld [vmem:[%s2121 + $0x18] sm:$0xf]
        %v2129 = vld [vmem:[%s2121 + $0x1c] sm:$0xf]
        %v2130 = vld [vmem:[%s2121 + $0x20] sm:$0xf]
        %v2131 = vld [vmem:[%s2121 + $0x24] sm:$0xf]
        %v2132 = vld [vmem:[%s2121 + $0x28] sm:$0xf]
        %v2133 = vld [vmem:[%s2121 + $0x2c] sm:$0xf]
        %v2134 = vld [vmem:[%s2121 + $0x30] sm:$0xf]
        %v2135 = vld [vmem:[%s2121 + $0x34] sm:$0xf]
        %v2136 = vld [vmem:[%s2121 + $0x38] sm:$0xf]
        %v2137 = vld [vmem:[%s2121 + $0x3c] sm:$0xf]
        %v2138 = vpack.c.b16 %v930, %v929
        %v2139 = vpack.c.b16 %v932, %v931
        %v2140 = vpack.c.b16 %v934, %v933
        %v2141 = vpack.c.b16 %v935, %v935
        %v2162 = vunpack.c.l.b16 %v2122
        %v2163 = vunpack.c.l.b16 %v2123
        %v2164 = vunpack.c.l.b16 %v2124
        %v2165 = vunpack.c.l.b16 %v2125
        %v2166 = vunpack.c.l.b16 %v2126
        %v2167 = vunpack.c.l.b16 %v2127
        %v2168 = vunpack.c.l.b16 %v2128
        %v2169 = vunpack.c.l.b16 %v2129
        %v2170 = vunpack.c.l.b16 %v2130
        %v2171 = vunpack.c.l.b16 %v2131
        %v2172 = vunpack.c.l.b16 %v2132
        %v2173 = vunpack.c.l.b16 %v2133
        %v2174 = vunpack.c.l.b16 %v2134
        %v2175 = vunpack.c.l.b16 %v2135
        %v2176 = vunpack.c.l.b16 %v2136
        %v2177 = vunpack.c.l.b16 %v2137
        %v2178 = vpack.c.b16 %v2163, %v2162
        %v2179 = vpack.c.b16 %v2165, %v2164
        %v2180 = vpack.c.b16 %v2167, %v2166
        %v2181 = vpack.c.b16 %v2169, %v2168
        %v2182 = vpack.c.b16 %v2171, %v2170
        %v2183 = vpack.c.b16 %v2173, %v2172
        %v2184 = vpack.c.b16 %v2175, %v2174
        %v2185 = vpack.c.b16 %v2177, %v2176
        %2194 = vmatprep.subr.bf16.mxu0 0
        %2195 = vmatpush1.bf16.msra.mxu0 %v2178
        %2196 = vmatprep.subr.bf16.mxu0 0
        %2197 = vmatpush1.bf16.msra.mxu0 %v2179
        %2198 = vmatprep.subr.bf16.mxu0 0
        %2199 = vmatpush1.bf16.msra.mxu0 %v2180
        %2200 = vmatprep.subr.bf16.mxu0 0
        %2201 = vmatpush1.bf16.msra.mxu0 %v2181
        %2202 = vmatprep.subr.bf16.mxu0 0
        %2203 = vmatpush1.bf16.msra.mxu0 %v2182
        %2204 = vmatprep.subr.bf16.mxu0 0
        %2205 = vmatpush1.bf16.msra.mxu0 %v2183
        %2206 = vmatprep.subr.bf16.mxu0 0
        %2207 = vmatpush1.bf16.msra.mxu0 %v2184
        %2208 = vmatprep.subr.bf16.mxu0 0
        %2209 = vmatpush1.bf16.msra.mxu0 %v2185
        %2210 = vmatprep.subr.bf16.mxu0 0
        %2211 = vmatpush1.bf16.msra.mxu0 0
        %2212 = vmatprep.subr.bf16.mxu0 0
        %2213 = vmatpush1.bf16.msra.mxu0 0
        %2214 = vmatprep.subr.bf16.mxu0 0
        %2215 = vmatpush1.bf16.msra.mxu0 0
        %2216 = vmatprep.subr.bf16.mxu0 0
        %2217 = vmatpush1.bf16.msra.mxu0 0
        %2218 = vmatprep.subr.bf16.mxu0 0
        %2219 = vmatpush1.bf16.msra.mxu0 0
        %2220 = vmatprep.subr.bf16.mxu0 0
        %2221 = vmatpush1.bf16.msra.mxu0 0
        %2222 = vmatprep.subr.bf16.mxu0 0
        %2223 = vmatpush1.bf16.msra.mxu0 0
        %2224 = vmatprep.subr.bf16.mxu0 0
        %2225 = vmatpush1.bf16.msra.mxu0 0
        %2226 = vmatprep.mubr.bf16.mxu0 0
        %2227 = vmatmul.mubr.bf16.gmra.mrb[0].mxu0 %v2138
        %v2228 = vpop.f32.mrb[0].mxu0
        %v2229 = vadd.f32 0.0, %v2228
        %v2230 = vpop.f32.mrb[0].mxu0
        %v2231 = vpop.f32.mrb[0].mxu0
        %v2232 = vadd.f32 0.0, %v2231
        %v2233 = vpop.f32.mrb[0].mxu0
        %2234 = vmatprep.mubr.bf16.mxu0 0
        %2235 = vmatmul.mubr.bf16.gmra.mrb[0].mxu0 %v2139
        %v2236 = vpop.f32.mrb[0].mxu0
        %v2237 = vadd.f32 0.0, %v2236
        %v2238 = vpop.f32.mrb[0].mxu0
        %v2239 = vpop.f32.mrb[0].mxu0
        %v2240 = vadd.f32 0.0, %v2239
        %v2241 = vpop.f32.mrb[0].mxu0
        %2242 = vmatprep.mubr.bf16.mxu0 0
        %2243 = vmatmul.mubr.bf16.gmra.mrb[0].mxu0 %v2140
        %v2244 = vpop.f32.mrb[0].mxu0
        %v2245 = vadd.f32 0.0, %v2244
        %v2246 = vpop.f32.mrb[0].mxu0
        %v2247 = vpop.f32.mrb[0].mxu0
        %v2248 = vadd.f32 0.0, %v2247
        %v2249 = vpop.f32.mrb[0].mxu0
        %2250 = vmatprep.mubr.bf16.mxu0 0
        %2251 = vmatmul.mubr.bf16.gmra.mrb[0].mxu0 %v2141
        %v2252 = vpop.f32.mrb[0].mxu0
        %v2253 = vadd.f32 0.0, %v2252
        %v2254 = vpop.f32.mrb[0].mxu0
        %v2255 = vpop.f32.mrb[0].mxu0
        %v2256 = vpop.f32.mrb[0].mxu0
        %2257 = vdwg.mxu0
        %v2258 = vadd.f32 %v2114, %v2229
        %v2259 = vadd.f32 %v2115, %v2232
        %v2260 = vadd.f32 %v2116, %v2237
        %v2261 = vadd.f32 %v2117, %v2240
        %v2262 = vadd.f32 %v2118, %v2245
        %v2263 = vadd.f32 %v2119, %v2248
        %v2264 = vadd.f32 %v2120, %v2253
        %s2265 = scalar_lea.vmem [#allocation6], 512
        %v2266 = vld [vmem:[%s2265] sm:$0xf]
        %v2267 = vld [vmem:[%s2265 + $0x4] sm:$0xf]
        %v2268 = vld [vmem:[%s2265 + $0x8] sm:$0xf]
        %v2269 = vld [vmem:[%s2265 + $0xc] sm:$0xf]
        %v2270 = vld [vmem:[%s2265 + $0x10] sm:$0xf]
        %v2271 = vld [vmem:[%s2265 + $0x14] sm:$0xf]
        %v2272 = vld [vmem:[%s2265 + $0x18] sm:$0xf]
        %v2273 = vld [vmem:[%s2265 + $0x1c] sm:$0xf]
        %v2274 = vld [vmem:[%s2265 + $0x20] sm:$0xf]
        %v2275 = vld [vmem:[%s2265 + $0x24] sm:$0xf]
        %v2276 = vld [vmem:[%s2265 + $0x28] sm:$0xf]
        %v2277 = vld [vmem:[%s2265 + $0x2c] sm:$0xf]
        %v2278 = vld [vmem:[%s2265 + $0x30] sm:$0xf]
        %v2279 = vld [vmem:[%s2265 + $0x34] sm:$0xf]
        %v2280 = vld [vmem:[%s2265 + $0x38] sm:$0xf]
        %v2281 = vld [vmem:[%s2265 + $0x3c] sm:$0xf]
        %v2283 = vunpack.c.l.b16 %v1095
        %v2284 = vpack.c.b16 %v1401, %v1400
        %v2285 = vpack.c.b16 %v1403, %v1402
        %v2286 = vpack.c.b16 %v1405, %v1404
        %v2287 = vpack.c.b16 %v2283, %v2283
        %v2308 = vunpack.c.l.b16 %v2266
        %v2309 = vunpack.c.l.b16 %v2267
        %v2310 = vunpack.c.l.b16 %v2268
        %v2311 = vunpack.c.l.b16 %v2269
        %v2312 = vunpack.c.l.b16 %v2270
        %v2313 = vunpack.c.l.b16 %v2271
        %v2314 = vunpack.c.l.b16 %v2272
        %v2315 = vunpack.c.l.b16 %v2273
        %v2316 = vunpack.c.l.b16 %v2274
        %v2317 = vunpack.c.l.b16 %v2275
        %v2318 = vunpack.c.l.b16 %v2276
        %v2319 = vunpack.c.l.b16 %v2277
        %v2320 = vunpack.c.l.b16 %v2278
        %v2321 = vunpack.c.l.b16 %v2279
        %v2322 = vunpack.c.l.b16 %v2280
        %v2323 = vunpack.c.l.b16 %v2281
        %v2324 = vpack.c.b16 %v2309, %v2308
        %v2325 = vpack.c.b16 %v2311, %v2310
        %v2326 = vpack.c.b16 %v2313, %v2312
        %v2327 = vpack.c.b16 %v2315, %v2314
        %v2328 = vpack.c.b16 %v2317, %v2316
        %v2329 = vpack.c.b16 %v2319, %v2318
        %v2330 = vpack.c.b16 %v2321, %v2320
        %v2331 = vpack.c.b16 %v2323, %v2322
        %2340 = vmatprep.subr.bf16.mxu0 0
        %2341 = vmatpush1.bf16.msra.mxu0 %v2324
        %2342 = vmatprep.subr.bf16.mxu0 0
        %2343 = vmatpush1.bf16.msra.mxu0 %v2325
        %2344 = vmatprep.subr.bf16.mxu0 0
        %2345 = vmatpush1.bf16.msra.mxu0 %v2326
        %2346 = vmatprep.subr.bf16.mxu0 0
        %2347 = vmatpush1.bf16.msra.mxu0 %v2327
        %2348 = vmatprep.subr.bf16.mxu0 0
        %2349 = vmatpush1.bf16.msra.mxu0 %v2328
        %2350 = vmatprep.subr.bf16.mxu0 0
        %2351 = vmatpush1.bf16.msra.mxu0 %v2329
        %2352 = vmatprep.subr.bf16.mxu0 0
        %2353 = vmatpush1.bf16.msra.mxu0 %v2330
        %2354 = vmatprep.subr.bf16.mxu0 0
        %2355 = vmatpush1.bf16.msra.mxu0 %v2331
        %2356 = vmatprep.subr.bf16.mxu0 0
        %2357 = vmatpush1.bf16.msra.mxu0 0
        %2358 = vmatprep.subr.bf16.mxu0 0
        %2359 = vmatpush1.bf16.msra.mxu0 0
        %2360 = vmatprep.subr.bf16.mxu0 0
        %2361 = vmatpush1.bf16.msra.mxu0 0
        %2362 = vmatprep.subr.bf16.mxu0 0
        %2363 = vmatpush1.bf16.msra.mxu0 0
        %2364 = vmatprep.subr.bf16.mxu0 0
        %2365 = vmatpush1.bf16.msra.mxu0 0
        %2366 = vmatprep.subr.bf16.mxu0 0
        %2367 = vmatpush1.bf16.msra.mxu0 0
        %2368 = vmatprep.subr.bf16.mxu0 0
        %2369 = vmatpush1.bf16.msra.mxu0 0
        %2370 = vmatprep.subr.bf16.mxu0 0
        %2371 = vmatpush1.bf16.msra.mxu0 0
        %2372 = vmatprep.mubr.bf16.mxu0 0
        %2373 = vmatmul.mubr.bf16.gmra.mrb[0].mxu0 %v2284
        %v2374 = vpop.f32.mrb[0].mxu0
        %v2375 = vadd.f32 0.0, %v2374
        %v2376 = vpop.f32.mrb[0].mxu0
        %v2377 = vpop.f32.mrb[0].mxu0
        %v2378 = vadd.f32 0.0, %v2377
        %v2379 = vpop.f32.mrb[0].mxu0
        %2380 = vmatprep.mubr.bf16.mxu0 0
        %2381 = vmatmul.mubr.bf16.gmra.mrb[0].mxu0 %v2285
        %v2382 = vpop.f32.mrb[0].mxu0
        %v2383 = vadd.f32 0.0, %v2382
        %v2384 = vpop.f32.mrb[0].mxu0
        %v2385 = vpop.f32.mrb[0].mxu0
        %v2386 = vadd.f32 0.0, %v2385
        %v2387 = vpop.f32.mrb[0].mxu0
        %2388 = vmatprep.mubr.bf16.mxu0 0
        %2389 = vmatmul.mubr.bf16.gmra.mrb[0].mxu0 %v2286
        %v2390 = vpop.f32.mrb[0].mxu0
        %v2391 = vadd.f32 0.0, %v2390
        %v2392 = vpop.f32.mrb[0].mxu0
        %v2393 = vpop.f32.mrb[0].mxu0
        %v2394 = vadd.f32 0.0, %v2393
        %v2395 = vpop.f32.mrb[0].mxu0
        %2396 = vmatprep.mubr.bf16.mxu0 0
        %2397 = vmatmul.mubr.bf16.gmra.mrb[0].mxu0 %v2287
        %v2398 = vpop.f32.mrb[0].mxu0
        %v2399 = vadd.f32 0.0, %v2398
        %v2400 = vpop.f32.mrb[0].mxu0
        %v2401 = vpop.f32.mrb[0].mxu0
        %v2402 = vpop.f32.mrb[0].mxu0
        %2403 = vdwg.mxu0
        %v2404 = vadd.f32 %v2258, %v2375
        %v2405 = vadd.f32 %v2259, %v2378
        %v2406 = vadd.f32 %v2260, %v2383
        %v2407 = vadd.f32 %v2261, %v2386
        %v2408 = vadd.f32 %v2262, %v2391
        %v2409 = vadd.f32 %v2263, %v2394
        %v2410 = vadd.f32 %v2264, %v2399
        %v2411 = vld [vmem:[%s5] sm:$0x1]
        %v2413 = vlaneseq
        %v2414 = vshrl.u32 %v2413, 7
        %v2415 = vsub.s32 0, %v2414
        %v2416 = vrot.slane %v2411, %v2415
        %v2418 = vmul.f32 %v2404, %v2416
        %v2419 = vmul.f32 %v2405, %v2416
        %v2420 = vmul.f32 %v2406, %v2416
        %v2421 = vmul.f32 %v2407, %v2416
        %v2422 = vmul.f32 %v2408, %v2416
        %v2423 = vmul.f32 %v2409, %v2416
        %v2424 = vmul.f32 %v2410, %v2416
        %v2425 = vld [vmem:[%s6] sm:$0x1]
        %v2427 = vlaneseq
        %v2428 = vshrl.u32 %v2427, 7
        %v2429 = vsub.s32 0, %v2428
        %v2430 = vrot.slane %v2425, %v2429
        %v2432 = vadd.f32 %v2418, %v2430
        %v2433 = vadd.f32 %v2419, %v2430
        %v2434 = vadd.f32 %v2420, %v2430
        %v2435 = vadd.f32 %v2421, %v2430
        %v2436 = vadd.f32 %v2422, %v2430
        %v2437 = vadd.f32 %v2423, %v2430
        %v2438 = vadd.f32 %v2424, %v2430
        %v2439 = vmax.f32 %v2432, 0.0
        %v2440 = vmax.f32 %v2433, 0.0
        %v2441 = vmax.f32 %v2434, 0.0
        %v2442 = vmax.f32 %v2435, 0.0
        %v2443 = vmax.f32 %v2436, 0.0
        %v2444 = vmax.f32 %v2437, 0.0
        %v2445 = vmax.f32 %v2438, 0.0
        %v2446 = vpack.c.bf16 %v2440, %v2439
        %v2447 = vpack.c.bf16 %v2442, %v2441
        %v2448 = vpack.c.bf16 %v2444, %v2443
        %v2449 = vpack.c.bf16 %v2445, %v2445
        %v2450 = vld [vmem:[#allocation7] sm:$0xf]
        %v2451 = vld [vmem:[#allocation7 + $0x4] sm:$0xf]
        %v2452 = vld [vmem:[#allocation7 + $0x8] sm:$0xf]
        %v2453 = vld [vmem:[#allocation7 + $0xc] sm:$0xf]
        %v2454 = vld [vmem:[#allocation7 + $0x10] sm:$0xf]
        %v2455 = vld [vmem:[#allocation7 + $0x14] sm:$0xf]
        %v2456 = vld [vmem:[#allocation7 + $0x18] sm:$0xf]
        %v2457 = vld [vmem:[#allocation7 + $0x1c] sm:$0xf]
        %v2458 = vld [vmem:[#allocation7 + $0x20] sm:$0xf]
        %v2459 = vld [vmem:[#allocation7 + $0x24] sm:$0xf]
        %v2460 = vld [vmem:[#allocation7 + $0x28] sm:$0xf]
        %v2461 = vld [vmem:[#allocation7 + $0x2c] sm:$0xf]
        %v2462 = vld [vmem:[#allocation7 + $0x30] sm:$0xf]
        %v2463 = vld [vmem:[#allocation7 + $0x34] sm:$0xf]
        %v2464 = vld [vmem:[#allocation7 + $0x38] sm:$0xf]
        %v2465 = vld [vmem:[#allocation7 + $0x3c] sm:$0xf]
        %v2482 = vunpack.c.l.b16 %v2450
        %v2483 = vunpack.c.l.b16 %v2451
        %v2484 = vunpack.c.l.b16 %v2452
        %v2485 = vunpack.c.l.b16 %v2453
        %v2486 = vunpack.c.l.b16 %v2454
        %v2487 = vunpack.c.l.b16 %v2455
        %v2488 = vunpack.c.l.b16 %v2456
        %v2489 = vunpack.c.l.b16 %v2457
        %v2490 = vunpack.c.l.b16 %v2458
        %v2491 = vunpack.c.l.b16 %v2459
        %v2492 = vunpack.c.l.b16 %v2460
        %v2493 = vunpack.c.l.b16 %v2461
        %v2494 = vunpack.c.l.b16 %v2462
        %v2495 = vunpack.c.l.b16 %v2463
        %v2496 = vunpack.c.l.b16 %v2464
        %v2497 = vunpack.c.l.b16 %v2465
        %v2498 = vpack.c.b16 %v2483, %v2482
        %v2499 = vpack.c.b16 %v2485, %v2484
        %v2500 = vpack.c.b16 %v2487, %v2486
        %v2501 = vpack.c.b16 %v2489, %v2488
        %v2502 = vpack.c.b16 %v2491, %v2490
        %v2503 = vpack.c.b16 %v2493, %v2492
        %v2504 = vpack.c.b16 %v2495, %v2494
        %v2505 = vpack.c.b16 %v2497, %v2496
        %2514 = vmatprep.subr.bf16.mxu0 0
        %2515 = vmatpush1.bf16.msra.mxu0 %v2498
        %2516 = vmatprep.subr.bf16.mxu0 0
        %2517 = vmatpush1.bf16.msra.mxu0 %v2499
        %2518 = vmatprep.subr.bf16.mxu0 0
        %2519 = vmatpush1.bf16.msra.mxu0 %v2500
        %2520 = vmatprep.subr.bf16.mxu0 0
        %2521 = vmatpush1.bf16.msra.mxu0 %v2501
        %2522 = vmatprep.subr.bf16.mxu0 0
        %2523 = vmatpush1.bf16.msra.mxu0 %v2502
        %2524 = vmatprep.subr.bf16.mxu0 0
        %2525 = vmatpush1.bf16.msra.mxu0 %v2503
        %2526 = vmatprep.subr.bf16.mxu0 0
        %2527 = vmatpush1.bf16.msra.mxu0 %v2504
        %2528 = vmatprep.subr.bf16.mxu0 0
        %2529 = vmatpush1.bf16.msra.mxu0 %v2505
        %2530 = vmatprep.subr.bf16.mxu0 0
        %2531 = vmatpush1.bf16.msra.mxu0 0
        %2532 = vmatprep.subr.bf16.mxu0 0
        %2533 = vmatpush1.bf16.msra.mxu0 0
        %2534 = vmatprep.subr.bf16.mxu0 0
        %2535 = vmatpush1.bf16.msra.mxu0 0
        %2536 = vmatprep.subr.bf16.mxu0 0
        %2537 = vmatpush1.bf16.msra.mxu0 0
        %2538 = vmatprep.subr.bf16.mxu0 0
        %2539 = vmatpush1.bf16.msra.mxu0 0
        %2540 = vmatprep.subr.bf16.mxu0 0
        %2541 = vmatpush1.bf16.msra.mxu0 0
        %2542 = vmatprep.subr.bf16.mxu0 0
        %2543 = vmatpush1.bf16.msra.mxu0 0
        %2544 = vmatprep.subr.bf16.mxu0 0
        %2545 = vmatpush1.bf16.msra.mxu0 0
        %2546 = vmatprep.mubr.bf16.mxu0 0
        %2547 = vmatmul.mubr.bf16.gmra.mrb[0].mxu0 %v2446
        %v2548 = vpop.f32.mrb[0].mxu0
        %v2549 = vadd.f32 0.0, %v2548
        %v2550 = vpop.f32.mrb[0].mxu0
        %v2551 = vpop.f32.mrb[0].mxu0
        %v2552 = vadd.f32 0.0, %v2551
        %v2553 = vpop.f32.mrb[0].mxu0
        %2554 = vmatprep.mubr.bf16.mxu0 0
        %2555 = vmatmul.mubr.bf16.gmra.mrb[0].mxu0 %v2447
        %v2556 = vpop.f32.mrb[0].mxu0
        %v2557 = vadd.f32 0.0, %v2556
        %v2558 = vpop.f32.mrb[0].mxu0
        %v2559 = vpop.f32.mrb[0].mxu0
        %v2560 = vadd.f32 0.0, %v2559
        %v2561 = vpop.f32.mrb[0].mxu0
        %2562 = vmatprep.mubr.bf16.mxu0 0
        %2563 = vmatmul.mubr.bf16.gmra.mrb[0].mxu0 %v2448
        %v2564 = vpop.f32.mrb[0].mxu0
        %v2565 = vadd.f32 0.0, %v2564
        %v2566 = vpop.f32.mrb[0].mxu0
        %v2567 = vpop.f32.mrb[0].mxu0
        %v2568 = vadd.f32 0.0, %v2567
        %v2569 = vpop.f32.mrb[0].mxu0
        %2570 = vmatprep.mubr.bf16.mxu0 0
        %2571 = vmatmul.mubr.bf16.gmra.mrb[0].mxu0 %v2449
        %v2572 = vpop.f32.mrb[0].mxu0
        %v2573 = vadd.f32 0.0, %v2572
        %v2574 = vpop.f32.mrb[0].mxu0
        %v2575 = vpop.f32.mrb[0].mxu0
        %v2576 = vpop.f32.mrb[0].mxu0
        %2577 = vdwg.mxu0
        %v2578 = vld [vmem:[%s8] sm:$0x1]
        %v2580 = vlaneseq
        %v2581 = vshrl.u32 %v2580, 7
        %v2582 = vsub.s32 0, %v2581
        %v2583 = vrot.slane %v2578, %v2582
        %v2585 = vmul.f32 %v2549, %v2583
        %v2586 = vmul.f32 %v2552, %v2583
        %v2587 = vmul.f32 %v2557, %v2583
        %v2588 = vmul.f32 %v2560, %v2583
        %v2589 = vmul.f32 %v2565, %v2583
        %v2590 = vmul.f32 %v2568, %v2583
        %v2591 = vmul.f32 %v2573, %v2583
        %v2592 = vld [vmem:[%s9] sm:$0x1]
        %v2594 = vlaneseq
        %v2595 = vshrl.u32 %v2594, 7
        %v2596 = vsub.s32 0, %v2595
        %v2597 = vrot.slane %v2592, %v2596
        %v2599 = vadd.f32 %v2585, %v2597
        %v2600 = vadd.f32 %v2586, %v2597
        %v2601 = vadd.f32 %v2587, %v2597
        %v2602 = vadd.f32 %v2588, %v2597
        %v2603 = vadd.f32 %v2589, %v2597
        %v2604 = vadd.f32 %v2590, %v2597
        %v2605 = vadd.f32 %v2591, %v2597
        %2606 = vst [vmem:[%s423] sm:$0x7f] %v2599
        %2607 = vst [vmem:[%s423 + $0x8] sm:$0x7f] %v2600
        %2608 = vst [vmem:[%s423 + $0x10] sm:$0x7f] %v2601
        %2609 = vst [vmem:[%s423 + $0x18] sm:$0x7f] %v2602
        %2610 = vst [vmem:[%s423 + $0x20] sm:$0x7f] %v2603
        %2611 = vst [vmem:[%s423 + $0x28] sm:$0x7f] %v2604
        %2612 = vst [vmem:[%s423 + $0x30] sm:$0x7f] %v2605
        %p2613 = scmp.lt.s32.totalorder %s26, 1
        %s2614 = scalar_select %p2613, %s26, 1
        %s2615 = smul.addr %s2614, 7
        %s2616 = smul.addr %s2615, 8
        %s2617 = scalar_lea.vmem %s10, %s2616
        // Predicated region
        $region77: #{tpu_custom_call.1} parent=59 // pred_check
          %p2618 = pneg %p259
        $region78: #{tpu_custom_call.1} parent=59 // pred_check_branch
          %2620 = sbr.rel (%p2618) target = $region80
        $region79: #{tpu_custom_call.1} parent=59 // pred_region
          _
        $region80: #{tpu_custom_call.1} parent=59 // pred_fallthru
          _
      $region60: #{tpu_custom_call.1} parent=5 // pred_fallthru
        _
      %p2621 = scmp.le.s32.totalorder 2, %s21
      // Predicated region
      $region81: #{tpu_custom_call.1} parent=5 // pred_check
        %p2622 = pneg %p2621
      $region82: #{tpu_custom_call.1} parent=5 // pred_check_branch
        %2624 = sbr.rel (%p2622) target = $region84
      $region83: #{tpu_custom_call.1} parent=5 // pred_region
        %s2625 = ssub.s32 %s21, 2
        // Predicated region
        $region85: #{tpu_custom_call.1} parent=83 // pred_check
          %p2626 = pneg %p265
        $region86: #{tpu_custom_call.1} parent=83 // pred_check_branch
          %2628 = sbr.rel (%p2626) target = $region88
        $region87: #{tpu_custom_call.1} parent=83 // pred_region
          %p2629 = scmp.lt.s32.totalorder %s27, 1
          %s2630 = scalar_select %p2629, %s27, 1
          %s2631 = smul.addr %s2630, 7
          %s2632 = smul.addr %s2631, 8
          %s2633 = scalar_lea.vmem %s10, %s2632
        $region88: #{tpu_custom_call.1} parent=83 // pred_fallthru
          _
      $region84: #{tpu_custom_call.1} parent=5 // pred_fallthru
        _
    $region6: #{tpu_custom_call.1} parent=1 // loop_footer
      %s25 = sadd.s32 1, %s21
    $region7: #{tpu_custom_call.1} parent=1 // loop_footer_branch
      %20 = sbr.rel target = $region3
    $region8: #{tpu_custom_call.1} parent=1 // loop_exit
      _
    %2634 = vsyncpa [#allocation3], 1
    %s2635 = scalar_lea.sflag [#allocation3], 1
    %2636 = vsyncpa %s2635, 1
    %2637 = vsyncpa [#allocation5], 1
    %2638 = vsyncpa [#allocation8], 1

</llo_original>
